<compile_context>
chip_gen: v7x
topology: tpu7x:2x2x1
jax: 0.10.0
libtpu: 0.0.40
codegen_flags: <defaults>
</compile_context>

<pallas_src>
import jax
import jax.numpy as jnp
from jax.experimental import pallas as pl
from jax.experimental.pallas import tpu as pltpu


def _round_up(x, m):
    return (x + m - 1) // m * m


def _decoder_kernel(
    xh_ref, c0_ref, enc_ref,        # activations (f32 / bf16)
    wl_ref, bl_ref,                 # packed LSTM weight (2H,4H) bf16, bias (1,4H) f32
    wcc_ref, wch_ref, bc_ref,       # concat-linear halves (H,H) bf16, bias (1,H) f32
    wo_ref, bo_ref,                 # vocab tile (H,tO) bf16, bias tile (1,tO) f32
    logp_ref, hout_ref, cout_ref,   # outputs
    ah_sc, m_sc, l_sc,              # scratch: attention_hs, running max, running sumexp
):
    j = pl.program_id(0)
    nj = pl.num_programs(0)
    Hp = hout_ref.shape[-1]

    # ---------- one-time prologue: LSTM cell + attention + concat ----------
    @pl.when(j == 0)
    def _prologue():
        xh = xh_ref[...]                                            # (B, 2H) f32
        gates = jnp.dot(xh.astype(jnp.bfloat16), wl_ref[...],
                        preferred_element_type=jnp.float32) + bl_ref[...]
        i_g = jax.nn.sigmoid(gates[:, 0 * Hp:1 * Hp])
        f_g = jax.nn.sigmoid(gates[:, 1 * Hp:2 * Hp])
        g_g = jnp.tanh(gates[:, 2 * Hp:3 * Hp])
        o_g = jax.nn.sigmoid(gates[:, 3 * Hp:4 * Hp])
        c1 = f_g * c0_ref[...] + i_g * g_g
        h1 = o_g * jnp.tanh(c1)                                     # (B, H) f32

        # Luong "dot" attention over encoder outputs -- on the MXU.
        enc = enc_ref[...]                                          # (B, S, H) bf16
        q = h1.astype(jnp.bfloat16)[:, None, :]                     # (B, 1, H)
        s = jnp.einsum("bqh,bsh->bqs", q, enc,
                       preferred_element_type=jnp.float32)          # (B, 1, S)
        m = jnp.max(s, axis=-1, keepdims=True)
        e = jnp.exp(s - m)
        denom = jnp.sum(e, axis=-1, keepdims=True)
        attn = e * pl.reciprocal(denom, approx=True)                # (B, 1, S)
        ctx = jnp.einsum("bqs,bsh->bqh", attn.astype(jnp.bfloat16), enc,
                         preferred_element_type=jnp.float32)[:, 0, :]   # (B, H)

        # concat([context, h1]) @ W_concat.T + b  (split to avoid lane concat)
        pre = (jnp.dot(ctx.astype(jnp.bfloat16), wcc_ref[...],
                       preferred_element_type=jnp.float32)
               + jnp.dot(h1.astype(jnp.bfloat16), wch_ref[...],
                         preferred_element_type=jnp.float32)
               + bc_ref[...])
        ah_sc[...] = jnp.tanh(pre).astype(jnp.bfloat16)             # attention_hs

        hout_ref[...] = h1
        cout_ref[...] = c1
        m_sc[...] = jnp.full_like(m_sc, -jnp.inf)
        l_sc[...] = jnp.zeros_like(l_sc)

    # ---------- vocab tile j: logits + online max / sum-exp ----------
    logits = jnp.dot(ah_sc[...], wo_ref[...],
                     preferred_element_type=jnp.float32) + bo_ref[...]   # (B, tO)
    logp_ref[j] = logits                                            # resident (nO,B,tO)

    m_prev = m_sc[...]
    m_new = jnp.maximum(m_prev, jnp.max(logits, axis=-1, keepdims=True))
    l_sc[...] = (l_sc[...] * jnp.exp(m_prev - m_new)
                 + jnp.sum(jnp.exp(logits - m_new), axis=-1, keepdims=True))
    m_sc[...] = m_new

    # ---------- finalize log-softmax on the last tile ----------
    @pl.when(j == nj - 1)
    def _finalize():
        lse = m_sc[...] + jnp.log(l_sc[...])                        # (B, 1)
        logp_ref[...] = logp_ref[...] - lse[None, :, :]


def init_params(key, hidden_size, output_size):
    """Creates torch-equivalent params and pre-packs them (one-time) into the
    padded, transposed, bf16 layouts the kernel consumes."""
    H, O = hidden_size, output_size
    Hp = _round_up(H, 128)
    Op = _round_up(O, 128)
    if Op % 512 == 0:
        tO = 512
    elif Op % 256 == 0:
        tO = 256
    else:
        tO = 128
    tO = min(tO, Op)

    ks = jax.random.split(key, 6)
    s = 0.1
    emb = jax.random.normal(ks[0], (O, H), jnp.float32)
    w_ih = s * jax.random.normal(ks[1], (4 * H, H), jnp.float32)   # torch (4H,H), i,f,g,o
    w_hh = s * jax.random.normal(ks[2], (4 * H, H), jnp.float32)
    b_ih = s * jax.random.normal(ks[3], (4 * H,), jnp.float32)
    b_hh = jnp.zeros((4 * H,), jnp.float32)
    w_concat = s * jax.random.normal(ks[4], (H, 2 * H), jnp.float32)
    b_concat = jnp.zeros((H,), jnp.float32)
    w_out = s * jax.random.normal(ks[5], (O, H), jnp.float32)
    b_out = jnp.zeros((O,), jnp.float32)

    # ---- one-time re-layout: x @ W layout, gates packed, padded, bf16 ----
    emb_p = jnp.zeros((O, Hp), jnp.float32).at[:, :H].set(emb)

    wl = jnp.zeros((2 * Hp, 4 * Hp), jnp.float32)
    bl = jnp.zeros((1, 4 * Hp), jnp.float32)
    bsum = b_ih + b_hh
    for k in range(4):
        wl = wl.at[:H, k * Hp:k * Hp + H].set(w_ih[k * H:(k + 1) * H, :].T)
        wl = wl.at[Hp:Hp + H, k * Hp:k * Hp + H].set(w_hh[k * H:(k + 1) * H, :].T)
        bl = bl.at[0, k * Hp:k * Hp + H].set(bsum[k * H:(k + 1) * H])

    wcc = jnp.zeros((Hp, Hp), jnp.float32).at[:H, :H].set(w_concat[:, :H].T)
    wch = jnp.zeros((Hp, Hp), jnp.float32).at[:H, :H].set(w_concat[:, H:].T)
    bc = jnp.zeros((1, Hp), jnp.float32).at[0, :H].set(b_concat)

    wo = jnp.zeros((Hp, Op), jnp.float32).at[:H, :O].set(w_out.T)
    # padded vocab columns get a huge negative bias so they never affect the LSE
    bo = jnp.full((1, Op), -1e30, jnp.float32).at[0, :O].set(b_out)

    return {
        "hidden_size": H, "output_size": O,
        "H_pad": Hp, "O_pad": Op, "o_tile": tO,
        "embedding": emb_p,                       # (O, Hp) f32
        "w_lstm": wl.astype(jnp.bfloat16),        # (2Hp, 4Hp)
        "b_lstm": bl,                             # (1, 4Hp) f32
        "w_cc": wcc.astype(jnp.bfloat16),         # (Hp, Hp)
        "w_ch": wch.astype(jnp.bfloat16),         # (Hp, Hp)
        "b_c": bc,                                # (1, Hp) f32
        "w_out": wo.astype(jnp.bfloat16),         # (Hp, Op)
        "b_out": bo,                              # (1, Op) f32
    }


def decoder_forward(params, input_ids, hc_state, encoder_output):
    """input_ids: (B,1) int32; hc_state: ((1,B,H),(1,B,H)); encoder_output: (B,S,H)."""
    H, O = params["hidden_size"], params["output_size"]
    Hp, Op, tO = params["H_pad"], params["O_pad"], params["o_tile"]
    h0, c0 = hc_state
    B = input_ids.shape[0]
    S = encoder_output.shape[1]
    Bp = _round_up(max(B, 1), 8)
    nO = Op // tO
    f32 = jnp.float32

    # Embedding lookup is a data-dependent gather -> keep it as JAX glue.
    emb = jnp.take(params["embedding"], input_ids[:, 0], axis=0)        # (B, Hp)

    # Pad activations (B -> sublane multiple, H -> lane multiple); weights are
    # already padded once in init_params.
    emb_p = jnp.zeros((Bp, Hp), f32).at[:B, :].set(emb.astype(f32))
    h0_p = jnp.zeros((Bp, Hp), f32).at[:B, :H].set(h0[0].astype(f32))
    c0_p = jnp.zeros((Bp, Hp), f32).at[:B, :H].set(c0[0].astype(f32))
    xh = jnp.concatenate([emb_p, h0_p], axis=1)                         # (Bp, 2Hp)
    enc_p = jnp.zeros((Bp, S, Hp), jnp.bfloat16).at[:B, :, :H].set(
        encoder_output.astype(jnp.bfloat16))

    full2 = lambda j: (0, 0)
    full3 = lambda j: (0, 0, 0)
    grid_spec = pltpu.PrefetchScalarGridSpec(
        num_scalar_prefetch=0,
        grid=(nO,),
        in_specs=[
            pl.BlockSpec((Bp, 2 * Hp), full2),          # xh
            pl.BlockSpec((Bp, Hp), full2),              # c0
            pl.BlockSpec((Bp, S, Hp), full3),           # encoder_output (bf16)
            pl.BlockSpec((2 * Hp, 4 * Hp), full2),      # packed LSTM weight
            pl.BlockSpec((1, 4 * Hp), full2),           # LSTM bias
            pl.BlockSpec((Hp, Hp), full2),              # concat W (context half)
            pl.BlockSpec((Hp, Hp), full2),              # concat W (hidden half)
            pl.BlockSpec((1, Hp), full2),               # concat bias
            pl.BlockSpec((Hp, tO), lambda j: (0, j)),   # w_out tile (streamed)
            pl.BlockSpec((1, tO), lambda j: (0, j)),    # b_out tile (streamed)
        ],
        out_specs=(
            pl.BlockSpec((nO, Bp, tO), full3),          # logp, VMEM-resident
            pl.BlockSpec((Bp, Hp), full2),              # new hidden
            pl.BlockSpec((Bp, Hp), full2),              # new cell
        ),
        scratch_shapes=[
            pltpu.VMEM((Bp, Hp), jnp.bfloat16),         # attention_hs
            pltpu.VMEM((Bp, 1), jnp.float32),           # running max
            pltpu.VMEM((Bp, 1), jnp.float32),           # running sum-exp
        ],
    )

    logp_t, h1_p, c1_p = pl.pallas_call(
        _decoder_kernel,
        grid_spec=grid_spec,
        out_shape=(
            jax.ShapeDtypeStruct((nO, Bp, tO), jnp.float32),
            jax.ShapeDtypeStruct((Bp, Hp), jnp.float32),
            jax.ShapeDtypeStruct((Bp, Hp), jnp.float32),
        ),
        input_output_aliases={1: 2},     # c0 buffer reused for new cell state
        compiler_params=pltpu.CompilerParams(
            dimension_semantics=("arbitrary",),          # online-LSE reduction axis
            vmem_limit_bytes=32 * 1024 * 1024,
        ),
    )(xh, c0_p, enc_p,
      params["w_lstm"], params["b_lstm"],
      params["w_cc"], params["w_ch"], params["b_c"],
      params["w_out"], params["b_out"])

    # layout plumbing: (nO, Bp, tO) -> (Bp, Op), then strip padding
    logp = logp_t.transpose(1, 0, 2).reshape(Bp, Op)[:B, :O]
    h1 = h1_p[:B, :H]
    c1 = c1_p[:B, :H]
    # Mirror PyTorch return: (log_probs, (hidden.unsqueeze(0), cell_state))
    return logp, (h1[None], c1[None])


def _reference(params, input_ids, hc_state, encoder_output):
    """Pure-JAX reference using the same (bf16-rounded) weights."""
    H, O, Hp = params["hidden_size"], params["output_size"], params["H_pad"]
    f32 = jnp.float32
    emb = jnp.take(params["embedding"], input_ids[:, 0], axis=0)[:, :H]
    h0, c0 = hc_state[0][0], hc_state[1][0]
    wl = params["w_lstm"].astype(f32)
    bl = params["b_lstm"][0]
    gates = []
    for k in range(4):
        wx = wl[:H, k * Hp:k * Hp + H]
        wh = wl[Hp:Hp + H, k * Hp:k * Hp + H]
        gates.append(emb @ wx + h0 @ wh + bl[k * Hp:k * Hp + H])
    i_g, f_g = jax.nn.sigmoid(gates[0]), jax.nn.sigmoid(gates[1])
    g_g, o_g = jnp.tanh(gates[2]), jax.nn.sigmoid(gates[3])
    c1 = f_g * c0 + i_g * g_g
    h1 = o_g * jnp.tanh(c1)
    scores = jnp.einsum("bh,bsh->bs", h1, encoder_output)
    attn = jax.nn.softmax(scores, axis=-1)
    ctx = jnp.einsum("bs,bsh->bh", attn, encoder_output)
    ah = jnp.tanh(ctx @ params["w_cc"].astype(f32)[:H, :H]
                  + h1 @ params["w_ch"].astype(f32)[:H, :H]
                  + params["b_c"][0, :H])
    logits = ah @ params["w_out"].astype(f32)[:H, :O] + params["b_out"][0, :O]
    return jax.nn.log_softmax(logits, axis=-1), h1, c1


if __name__ == "__main__":
    key = jax.random.PRNGKey(0)
    H, O, B, S = 32, 16, 2, 8
    pkey, ikey, hkey, ckey, ekey = jax.random.split(key, 5)

    params = init_params(pkey, H, O)
    input_ids = jax.random.randint(ikey, (B, 1), 0, O, dtype=jnp.int32)
    h0 = jax.random.normal(hkey, (1, B, H), jnp.float32)
    c0 = jax.random.normal(ckey, (1, B, H), jnp.float32)
    enc_out = jax.random.normal(ekey, (B, S, H), jnp.float32)

    logp, (h1, c1) = decoder_forward(params, input_ids, (h0, c0), enc_out)
    jax.block_until_ready((logp, h1, c1))

    assert logp.shape == (B, O)
    assert h1.shape == (1, B, H) and c1.shape == (1, B, H)
    assert bool(jnp.all(jnp.isfinite(logp)))
    # log_softmax rows should exp-sum to 1
    assert bool(jnp.allclose(jnp.sum(jnp.exp(logp), axis=1), 1.0, atol=1e-4))

    # cross-check against a pure-JAX reference (same bf16 weights; loose tol
    # covers bf16 activation casts + approx reciprocal in the attention softmax)
    ref_logp, ref_h1, ref_c1 = _reference(params, input_ids, (h0, c0), enc_out)
    assert bool(jnp.allclose(logp, ref_logp, atol=5e-2))
    assert bool(jnp.allclose(h1[0], ref_h1, atol=5e-2))
    assert bool(jnp.allclose(c1[0], ref_c1, atol=5e-2))
    print("KERNEL_OK")
</pallas_src>

<mosaic_0001>
module attributes {stable_mosaic.version = 11 : i64} {
  func.func @_decoder_kernel(%arg0: i32, %arg1: memref<8x256xf32, #tpu.memory_space<vmem>>, %arg2: memref<8x128xf32, #tpu.memory_space<vmem>>, %arg3: memref<8x8x128xbf16, #tpu.memory_space<vmem>>, %arg4: memref<256x512xbf16, #tpu.memory_space<vmem>>, %arg5: memref<1x512xf32, #tpu.memory_space<vmem>>, %arg6: memref<128x128xbf16, #tpu.memory_space<vmem>>, %arg7: memref<128x128xbf16, #tpu.memory_space<vmem>>, %arg8: memref<1x128xf32, #tpu.memory_space<vmem>>, %arg9: memref<128x128xbf16, #tpu.memory_space<vmem>>, %arg10: memref<1x128xf32, #tpu.memory_space<vmem>>, %arg11: memref<1x8x128xf32, #tpu.memory_space<vmem>>, %arg12: memref<8x128xf32, #tpu.memory_space<vmem>>, %arg13: memref<8x128xf32, #tpu.memory_space<vmem>>, %arg14: memref<8x128xbf16, #tpu.memory_space<vmem>>, %arg15: memref<8x1xf32, #tpu.memory_space<vmem>>, %arg16: memref<8x1xf32, #tpu.memory_space<vmem>>) attributes {dimension_semantics = [#tpu.dimension_semantics<arbitrary>], iteration_bounds = array<i64: 1>, scalar_prefetch = 0 : i64, scratch_operands = 3 : i64, tpu.core_type = #tpu.core_type<tc>, window_params = [{pipeline_mode = #tpu.pipeline_mode<synchronous>, transform_indices = @transform_0, window_bounds = array<i64: 8, 256>}, {pipeline_mode = #tpu.pipeline_mode<synchronous>, transform_indices = @transform_1, window_bounds = array<i64: 8, 128>}, {pipeline_mode = #tpu.pipeline_mode<synchronous>, transform_indices = @transform_2, window_bounds = array<i64: 8, 8, 128>}, {pipeline_mode = #tpu.pipeline_mode<synchronous>, transform_indices = @transform_3, window_bounds = array<i64: 256, 512>}, {pipeline_mode = #tpu.pipeline_mode<synchronous>, transform_indices = @transform_4, window_bounds = array<i64: 1, 512>}, {pipeline_mode = #tpu.pipeline_mode<synchronous>, transform_indices = @transform_5, window_bounds = array<i64: 128, 128>}, {pipeline_mode = #tpu.pipeline_mode<synchronous>, transform_indices = @transform_6, window_bounds = array<i64: 128, 128>}, {pipeline_mode = #tpu.pipeline_mode<synchronous>, transform_indices = @transform_7, window_bounds = array<i64: 1, 128>}, {transform_indices = @transform_8, window_bounds = array<i64: 128, 128>}, {transform_indices = @transform_9, window_bounds = array<i64: 1, 128>}, {pipeline_mode = #tpu.pipeline_mode<synchronous>, transform_indices = @transform_10, window_bounds = array<i64: 1, 8, 128>}, {pipeline_mode = #tpu.pipeline_mode<synchronous>, transform_indices = @transform_11, window_bounds = array<i64: 8, 128>}, {pipeline_mode = #tpu.pipeline_mode<synchronous>, transform_indices = @transform_12, window_bounds = array<i64: 8, 128>}]} {
    %c0_i32 = arith.constant 0 : i32
    %0 = arith.cmpi eq, %arg0, %c0_i32 : i32
    %1 = arith.extui %0 : i1 to i32
    %c0_i32_0 = arith.constant 0 : i32
    %2 = arith.cmpi ne, %1, %c0_i32_0 : i32
    scf.if %2 {
      %c0_20 = arith.constant 0 : index
      %c0_21 = arith.constant 0 : index
      %32 = vector.load %arg1[%c0_20, %c0_21] : memref<8x256xf32, #tpu.memory_space<vmem>>, vector<8x256xf32>
      %33 = arith.truncf %32 : vector<8x256xf32> to vector<8x256xbf16>
      %c0_22 = arith.constant 0 : index
      %c0_23 = arith.constant 0 : index
      %34 = vector.load %arg4[%c0_22, %c0_23] : memref<256x512xbf16, #tpu.memory_space<vmem>>, vector<256x512xbf16>
      %cst_24 = arith.constant dense<0.000000e+00> : vector<8x512xf32>
      %35 = tpu.matmul %33, %34, %cst_24 {dimension_numbers = #tpu.dot_dimension_numbers<[1], [0], [0], [1], [0, 0, 1, 1], [], []>} : vector<8x256xbf16>, vector<256x512xbf16>, vector<8x512xf32> -> vector<8x512xf32>
      %c0_25 = arith.constant 0 : index
      %c0_26 = arith.constant 0 : index
      %36 = vector.load %arg5[%c0_25, %c0_26] : memref<1x512xf32, #tpu.memory_space<vmem>>, vector<1x512xf32>
      %37 = vector.broadcast %36 : vector<1x512xf32> to vector<8x512xf32>
      %38 = arith.addf %35, %37 : vector<8x512xf32>
      %39 = vector.extract_strided_slice %38 {offsets = [0, 0], sizes = [8, 128], strides = [1, 1]} : vector<8x512xf32> to vector<8x128xf32>
      %40 = arith.negf %39 : vector<8x128xf32>
      %41 = math.exp %40 : vector<8x128xf32>
      %cst_27 = arith.constant 1.000000e+00 : f32
      %42 = vector.broadcast %cst_27 : f32 to vector<8x128xf32>
      %43 = arith.addf %42, %41 : vector<8x128xf32>
      %44 = arith.divf %42, %43 : vector<8x128xf32>
      %45 = vector.extract_strided_slice %38 {offsets = [0, 128], sizes = [8, 128], strides = [1, 1]} : vector<8x512xf32> to vector<8x128xf32>
      %46 = arith.negf %45 : vector<8x128xf32>
      %47 = math.exp %46 : vector<8x128xf32>
      %cst_28 = arith.constant 1.000000e+00 : f32
      %48 = vector.broadcast %cst_28 : f32 to vector<8x128xf32>
      %49 = arith.addf %48, %47 : vector<8x128xf32>
      %50 = arith.divf %48, %49 : vector<8x128xf32>
      %51 = vector.extract_strided_slice %38 {offsets = [0, 256], sizes = [8, 128], strides = [1, 1]} : vector<8x512xf32> to vector<8x128xf32>
      %52 = math.tanh %51 : vector<8x128xf32>
      %53 = vector.extract_strided_slice %38 {offsets = [0, 384], sizes = [8, 128], strides = [1, 1]} : vector<8x512xf32> to vector<8x128xf32>
      %54 = arith.negf %53 : vector<8x128xf32>
      %55 = math.exp %54 : vector<8x128xf32>
      %cst_29 = arith.constant 1.000000e+00 : f32
      %56 = vector.broadcast %cst_29 : f32 to vector<8x128xf32>
      %57 = arith.addf %56, %55 : vector<8x128xf32>
      %58 = arith.divf %56, %57 : vector<8x128xf32>
      %c0_30 = arith.constant 0 : index
      %c0_31 = arith.constant 0 : index
      %59 = vector.load %arg2[%c0_30, %c0_31] : memref<8x128xf32, #tpu.memory_space<vmem>>, vector<8x128xf32>
      %60 = arith.mulf %50, %59 : vector<8x128xf32>
      %61 = arith.mulf %44, %52 : vector<8x128xf32>
      %62 = arith.addf %60, %61 : vector<8x128xf32>
      %63 = math.tanh %62 : vector<8x128xf32>
      %64 = arith.mulf %58, %63 : vector<8x128xf32>
      %c0_32 = arith.constant 0 : index
      %c0_33 = arith.constant 0 : index
      %c0_34 = arith.constant 0 : index
      %65 = vector.load %arg3[%c0_32, %c0_33, %c0_34] : memref<8x8x128xbf16, #tpu.memory_space<vmem>>, vector<8x8x128xbf16>
      %66 = arith.truncf %64 : vector<8x128xf32> to vector<8x128xbf16>
      %67 = vector.shape_cast %66 : vector<8x128xbf16> to vector<8x1x128xbf16>
      "tpu.trace_start"() <{level = 10 : i32, message = "bqh,bsh->bqs"}> : () -> ()
      %cst_35 = arith.constant dense<0.000000e+00> : vector<8x1x8xf32>
      %68 = tpu.matmul %67, %65, %cst_35 {dimension_numbers = #tpu.dot_dimension_numbers<[2], [2], [1], [1], [0, 0, 0, 1, 1, 1], [0], [0]>} : vector<8x1x128xbf16>, vector<8x8x128xbf16>, vector<8x1x8xf32> -> vector<8x1x8xf32>
      "tpu.trace_stop"() : () -> ()
      %cst_36 = arith.constant dense<0xFF800000> : vector<8x1xf32>
      %69 = vector.multi_reduction <maximumf>, %68, %cst_36 [2] : vector<8x1x8xf32> to vector<8x1xf32>
      %70 = vector.shape_cast %69 : vector<8x1xf32> to vector<8x1x1xf32>
      %71 = vector.broadcast %70 : vector<8x1x1xf32> to vector<8x1x8xf32>
      %72 = arith.subf %68, %71 : vector<8x1x8xf32>
      %73 = math.exp %72 : vector<8x1x8xf32>
      %cst_37 = arith.constant dense<0.000000e+00> : vector<8x1xf32>
      %74 = vector.multi_reduction <add>, %73, %cst_37 [2] : vector<8x1x8xf32> to vector<8x1xf32>
      %75 = vector.shape_cast %74 : vector<8x1xf32> to vector<8x1x1xf32>
      %76 = tpu.reciprocal %75 {approx = true} : vector<8x1x1xf32> -> vector<8x1x1xf32>
      %77 = vector.broadcast %76 : vector<8x1x1xf32> to vector<8x1x8xf32>
      %78 = arith.mulf %73, %77 : vector<8x1x8xf32>
      %79 = arith.truncf %78 : vector<8x1x8xf32> to vector<8x1x8xbf16>
      "tpu.trace_start"() <{level = 10 : i32, message = "bqs,bsh->bqh"}> : () -> ()
      %cst_38 = arith.constant dense<0.000000e+00> : vector<8x1x128xf32>
      %80 = tpu.matmul %79, %65, %cst_38 {dimension_numbers = #tpu.dot_dimension_numbers<[2], [1], [1], [2], [0, 0, 0, 1, 1, 2], [0], [0]>} : vector<8x1x8xbf16>, vector<8x8x128xbf16>, vector<8x1x128xf32> -> vector<8x1x128xf32>
      "tpu.trace_stop"() : () -> ()
      %81 = vector.shape_cast %80 : vector<8x1x128xf32> to vector<8x128xf32>
      %82 = arith.truncf %81 : vector<8x128xf32> to vector<8x128xbf16>
      %c0_39 = arith.constant 0 : index
      %c0_40 = arith.constant 0 : index
      %83 = vector.load %arg6[%c0_39, %c0_40] : memref<128x128xbf16, #tpu.memory_space<vmem>>, vector<128x128xbf16>
      %cst_41 = arith.constant dense<0.000000e+00> : vector<8x128xf32>
      %84 = tpu.matmul %82, %83, %cst_41 {dimension_numbers = #tpu.dot_dimension_numbers<[1], [0], [0], [1], [0, 0, 1, 1], [], []>} : vector<8x128xbf16>, vector<128x128xbf16>, vector<8x128xf32> -> vector<8x128xf32>
      %85 = arith.truncf %64 : vector<8x128xf32> to vector<8x128xbf16>
      %c0_42 = arith.constant 0 : index
      %c0_43 = arith.constant 0 : index
      %86 = vector.load %arg7[%c0_42, %c0_43] : memref<128x128xbf16, #tpu.memory_space<vmem>>, vector<128x128xbf16>
      %cst_44 = arith.constant dense<0.000000e+00> : vector<8x128xf32>
      %87 = tpu.matmul %85, %86, %cst_44 {dimension_numbers = #tpu.dot_dimension_numbers<[1], [0], [0], [1], [0, 0, 1, 1], [], []>} : vector<8x128xbf16>, vector<128x128xbf16>, vector<8x128xf32> -> vector<8x128xf32>
      %88 = arith.addf %84, %87 : vector<8x128xf32>
      %c0_45 = arith.constant 0 : index
      %c0_46 = arith.constant 0 : index
      %89 = vector.load %arg8[%c0_45, %c0_46] : memref<1x128xf32, #tpu.memory_space<vmem>>, vector<1x128xf32>
      %90 = vector.broadcast %89 : vector<1x128xf32> to vector<8x128xf32>
      %91 = arith.addf %88, %90 : vector<8x128xf32>
      %92 = math.tanh %91 : vector<8x128xf32>
      %93 = arith.truncf %92 : vector<8x128xf32> to vector<8x128xbf16>
      %c0_47 = arith.constant 0 : index
      %c0_48 = arith.constant 0 : index
      %94 = vector.load %arg14[%c0_47, %c0_48] : memref<8x128xbf16, #tpu.memory_space<vmem>>, vector<8x128xbf16>
      tpu.vector_store %arg14[%c0_47, %c0_48], %93 {strides = array<i32>} : memref<8x128xbf16, #tpu.memory_space<vmem>>, vector<8x128xbf16>,
      %c0_49 = arith.constant 0 : index
      %c0_50 = arith.constant 0 : index
      %95 = vector.load %arg12[%c0_49, %c0_50] : memref<8x128xf32, #tpu.memory_space<vmem>>, vector<8x128xf32>
      tpu.vector_store %arg12[%c0_49, %c0_50], %64 {strides = array<i32>} : memref<8x128xf32, #tpu.memory_space<vmem>>, vector<8x128xf32>,
      %c0_51 = arith.constant 0 : index
      %c0_52 = arith.constant 0 : index
      %96 = vector.load %arg13[%c0_51, %c0_52] : memref<8x128xf32, #tpu.memory_space<vmem>>, vector<8x128xf32>
      tpu.vector_store %arg13[%c0_51, %c0_52], %62 {strides = array<i32>} : memref<8x128xf32, #tpu.memory_space<vmem>>, vector<8x128xf32>,
      %cst_53 = arith.constant 0xFF800000 : f32
      %97 = vector.broadcast %cst_53 : f32 to vector<8x1xf32>
      %c0_54 = arith.constant 0 : index
      %c0_55 = arith.constant 0 : index
      %98 = vector.load %arg15[%c0_54, %c0_55] : memref<8x1xf32, #tpu.memory_space<vmem>>, vector<8x1xf32>
      tpu.vector_store %arg15[%c0_54, %c0_55], %97 {strides = array<i32>} : memref<8x1xf32, #tpu.memory_space<vmem>>, vector<8x1xf32>,
      %cst_56 = arith.constant 0.000000e+00 : f32
      %99 = vector.broadcast %cst_56 : f32 to vector<8x1xf32>
      %c0_57 = arith.constant 0 : index
      %c0_58 = arith.constant 0 : index
      %100 = vector.load %arg16[%c0_57, %c0_58] : memref<8x1xf32, #tpu.memory_space<vmem>>, vector<8x1xf32>
      tpu.vector_store %arg16[%c0_57, %c0_58], %99 {strides = array<i32>} : memref<8x1xf32, #tpu.memory_space<vmem>>, vector<8x1xf32>,
    } else {
    }
    %c0 = arith.constant 0 : index
    %c0_1 = arith.constant 0 : index
    %3 = vector.load %arg14[%c0, %c0_1] : memref<8x128xbf16, #tpu.memory_space<vmem>>, vector<8x128xbf16>
    %c0_2 = arith.constant 0 : index
    %c0_3 = arith.constant 0 : index
    %4 = vector.load %arg9[%c0_2, %c0_3] : memref<128x128xbf16, #tpu.memory_space<vmem>>, vector<128x128xbf16>
    %cst = arith.constant dense<0.000000e+00> : vector<8x128xf32>
    %5 = tpu.matmul %3, %4, %cst {dimension_numbers = #tpu.dot_dimension_numbers<[1], [0], [0], [1], [0, 0, 1, 1], [], []>} : vector<8x128xbf16>, vector<128x128xbf16>, vector<8x128xf32> -> vector<8x128xf32>
    %c0_4 = arith.constant 0 : index
    %c0_5 = arith.constant 0 : index
    %6 = vector.load %arg10[%c0_4, %c0_5] : memref<1x128xf32, #tpu.memory_space<vmem>>, vector<1x128xf32>
    %7 = vector.broadcast %6 : vector<1x128xf32> to vector<8x128xf32>
    %8 = arith.addf %5, %7 : vector<8x128xf32>
    %9 = arith.index_cast %arg0 : i32 to index
    %c0_6 = arith.constant 0 : index
    %c0_7 = arith.constant 0 : index
    %10 = vector.load %arg11[%9, %c0_6, %c0_7] : memref<1x8x128xf32, #tpu.memory_space<vmem>>, vector<1x8x128xf32>
    %11 = vector.shape_cast %10 : vector<1x8x128xf32> to vector<8x128xf32>
    %12 = vector.shape_cast %8 : vector<8x128xf32> to vector<1x8x128xf32>
    tpu.vector_store %arg11[%9, %c0_6, %c0_7], %12 {strides = array<i32>} : memref<1x8x128xf32, #tpu.memory_space<vmem>>, vector<1x8x128xf32>,
    %c0_8 = arith.constant 0 : index
    %c0_9 = arith.constant 0 : index
    %13 = vector.load %arg15[%c0_8, %c0_9] : memref<8x1xf32, #tpu.memory_space<vmem>>, vector<8x1xf32>
    %cst_10 = arith.constant dense<0xFF800000> : vector<8xf32>
    %14 = vector.multi_reduction <maximumf>, %8, %cst_10 [1] : vector<8x128xf32> to vector<8xf32>
    %15 = vector.shape_cast %14 : vector<8xf32> to vector<8x1xf32>
    %16 = arith.maximumf %13, %15 : vector<8x1xf32>
    %c0_11 = arith.constant 0 : index
    %c0_12 = arith.constant 0 : index
    %17 = vector.load %arg16[%c0_11, %c0_12] : memref<8x1xf32, #tpu.memory_space<vmem>>, vector<8x1xf32>
    %18 = arith.subf %13, %16 : vector<8x1xf32>
    %19 = math.exp %18 : vector<8x1xf32>
    %20 = arith.mulf %17, %19 : vector<8x1xf32>
    %21 = vector.broadcast %16 : vector<8x1xf32> to vector<8x128xf32>
    %22 = arith.subf %8, %21 : vector<8x128xf32>
    %23 = math.exp %22 : vector<8x128xf32>
    %cst_13 = arith.constant dense<0.000000e+00> : vector<8xf32>
    %24 = vector.multi_reduction <add>, %23, %cst_13 [1] : vector<8x128xf32> to vector<8xf32>
    %25 = vector.shape_cast %24 : vector<8xf32> to vector<8x1xf32>
    %26 = arith.addf %20, %25 : vector<8x1xf32>
    %c0_14 = arith.constant 0 : index
    %c0_15 = arith.constant 0 : index
    %27 = vector.load %arg16[%c0_14, %c0_15] : memref<8x1xf32, #tpu.memory_space<vmem>>, vector<8x1xf32>
    tpu.vector_store %arg16[%c0_14, %c0_15], %26 {strides = array<i32>} : memref<8x1xf32, #tpu.memory_space<vmem>>, vector<8x1xf32>,
    %c0_16 = arith.constant 0 : index
    %c0_17 = arith.constant 0 : index
    %28 = vector.load %arg15[%c0_16, %c0_17] : memref<8x1xf32, #tpu.memory_space<vmem>>, vector<8x1xf32>
    tpu.vector_store %arg15[%c0_16, %c0_17], %16 {strides = array<i32>} : memref<8x1xf32, #tpu.memory_space<vmem>>, vector<8x1xf32>,
    %c0_i32_18 = arith.constant 0 : i32
    %29 = arith.cmpi eq, %arg0, %c0_i32_18 : i32
    %30 = arith.extui %29 : i1 to i32
    %c0_i32_19 = arith.constant 0 : i32
    %31 = arith.cmpi ne, %30, %c0_i32_19 : i32
    scf.if %31 {
      %c0_20 = arith.constant 0 : index
      %c0_21 = arith.constant 0 : index
      %32 = vector.load %arg15[%c0_20, %c0_21] : memref<8x1xf32, #tpu.memory_space<vmem>>, vector<8x1xf32>
      %c0_22 = arith.constant 0 : index
      %c0_23 = arith.constant 0 : index
      %33 = vector.load %arg16[%c0_22, %c0_23] : memref<8x1xf32, #tpu.memory_space<vmem>>, vector<8x1xf32>
      %34 = math.log %33 : vector<8x1xf32>
      %35 = arith.addf %32, %34 : vector<8x1xf32>
      %c0_24 = arith.constant 0 : index
      %c0_25 = arith.constant 0 : index
      %c0_26 = arith.constant 0 : index
      %36 = vector.load %arg11[%c0_24, %c0_25, %c0_26] : memref<1x8x128xf32, #tpu.memory_space<vmem>>, vector<1x8x128xf32>
      %37 = vector.shape_cast %35 : vector<8x1xf32> to vector<1x8x1xf32>
      %38 = vector.broadcast %37 : vector<1x8x1xf32> to vector<1x8x128xf32>
      %39 = arith.subf %36, %38 : vector<1x8x128xf32>
      %c0_27 = arith.constant 0 : index
      %c0_28 = arith.constant 0 : index
      %c0_29 = arith.constant 0 : index
      %40 = vector.load %arg11[%c0_27, %c0_28, %c0_29] : memref<1x8x128xf32, #tpu.memory_space<vmem>>, vector<1x8x128xf32>
      tpu.vector_store %arg11[%c0_27, %c0_28, %c0_29], %39 {strides = array<i32>} : memref<1x8x128xf32, #tpu.memory_space<vmem>>, vector<1x8x128xf32>,
    } else {
    }
    return
  }
  func.func @transform_0(%arg0: i32) -> (i32, i32) {
    %c0_i32 = arith.constant 0 : i32
    %c0_i32_0 = arith.constant 0 : i32
    %c0_i32_1 = arith.constant 0 : i32
    return %c0_i32, %c0_i32_0 : i32, i32
  }
  func.func @transform_1(%arg0: i32) -> (i32, i32) {
    %c0_i32 = arith.constant 0 : i32
    %c0_i32_0 = arith.constant 0 : i32
    %c0_i32_1 = arith.constant 0 : i32
    return %c0_i32, %c0_i32_0 : i32, i32
  }
  func.func @transform_2(%arg0: i32) -> (i32, i32, i32) {
    %c0_i32 = arith.constant 0 : i32
    %c0_i32_0 = arith.constant 0 : i32
    %c0_i32_1 = arith.constant 0 : i32
    %c0_i32_2 = arith.constant 0 : i32
    return %c0_i32, %c0_i32_0, %c0_i32_1 : i32, i32, i32
  }
  func.func @transform_3(%arg0: i32) -> (i32, i32) {
    %c0_i32 = arith.constant 0 : i32
    %c0_i32_0 = arith.constant 0 : i32
    %c0_i32_1 = arith.constant 0 : i32
    return %c0_i32, %c0_i32_0 : i32, i32
  }
  func.func @transform_4(%arg0: i32) -> (i32, i32) {
    %c0_i32 = arith.constant 0 : i32
    %c0_i32_0 = arith.constant 0 : i32
    %c0_i32_1 = arith.constant 0 : i32
    return %c0_i32, %c0_i32_0 : i32, i32
  }
  func.func @transform_5(%arg0: i32) -> (i32, i32) {
    %c0_i32 = arith.constant 0 : i32
    %c0_i32_0 = arith.constant 0 : i32
    %c0_i32_1 = arith.constant 0 : i32
    return %c0_i32, %c0_i32_0 : i32, i32
  }
  func.func @transform_6(%arg0: i32) -> (i32, i32) {
    %c0_i32 = arith.constant 0 : i32
    %c0_i32_0 = arith.constant 0 : i32
    %c0_i32_1 = arith.constant 0 : i32
    return %c0_i32, %c0_i32_0 : i32, i32
  }
  func.func @transform_7(%arg0: i32) -> (i32, i32) {
    %c0_i32 = arith.constant 0 : i32
    %c0_i32_0 = arith.constant 0 : i32
    %c0_i32_1 = arith.constant 0 : i32
    return %c0_i32, %c0_i32_0 : i32, i32
  }
  func.func @transform_8(%arg0: i32) -> (i32, i32) {
    %c0_i32 = arith.constant 0 : i32
    %c0_i32_0 = arith.constant 0 : i32
    return %c0_i32, %arg0 : i32, i32
  }
  func.func @transform_9(%arg0: i32) -> (i32, i32) {
    %c0_i32 = arith.constant 0 : i32
    %c0_i32_0 = arith.constant 0 : i32
    return %c0_i32, %arg0 : i32, i32
  }
  func.func @transform_10(%arg0: i32) -> (i32, i32, i32) {
    %c0_i32 = arith.constant 0 : i32
    %c0_i32_0 = arith.constant 0 : i32
    %c0_i32_1 = arith.constant 0 : i32
    %c0_i32_2 = arith.constant 0 : i32
    return %c0_i32, %c0_i32_0, %c0_i32_1 : i32, i32, i32
  }
  func.func @transform_11(%arg0: i32) -> (i32, i32) {
    %c0_i32 = arith.constant 0 : i32
    %c0_i32_0 = arith.constant 0 : i32
    %c0_i32_1 = arith.constant 0 : i32
    return %c0_i32, %c0_i32_0 : i32, i32
  }
  func.func @transform_12(%arg0: i32) -> (i32, i32) {
    %c0_i32 = arith.constant 0 : i32
    %c0_i32_0 = arith.constant 0 : i32
    %c0_i32_1 = arith.constant 0 : i32
    return %c0_i32, %c0_i32_0 : i32, i32
  }
}

</mosaic_0001>

<llo_original>
// kernel: tpu_custom_call.1
$region0: #{tpu_custom_call.1}
  #allocation0 [shape = 'u32[]', space=smem, size = 0x4, offset = 0x4, fixed_abs, tag = 'smem constant byte address 0x4 - core index']
  #allocation1 [shape = 'u32[144,128]{1,0:T(1,128)}', space=vmem, size = 0x12000, scoped, tag = 'internal scratch']
  #allocation2 [shape = 'bf16[8,128]{1,0:T(8,128)(2,1)}', space=vmem, size = 0x800, scoped, tag = 'scratch operand']
  #allocation3 [shape = 'f32[8,1]{1,0:T(8,128)}', space=vmem, size = 0x1000, scoped, tag = 'scratch operand']
  #allocation4 [shape = 'f32[8,1]{1,0:T(8,128)}', space=vmem, size = 0x1000, scoped, tag = 'scratch operand']
  %s0 = inlined_call_operand.vmem [shape: f32[8,256], index: 0, kind: input, shape index: {}]
  %s1 = inlined_call_operand.hbm [shape: f32[8,128], index: 1, kind: input, shape index: {}, may-alias: {1,12}]
  %s2 = inlined_call_operand.vmem [shape: bf16[8,8,128], index: 2, kind: input, shape index: {}]
  %s3 = inlined_call_operand.hbm [shape: bf16[256,512], index: 3, kind: input, shape index: {}]
  %s4 = inlined_call_operand.hbm [shape: f32[1,512], index: 4, kind: input, shape index: {}]
  %s5 = inlined_call_operand.hbm [shape: bf16[128,128], index: 5, kind: input, shape index: {}]
  %s6 = inlined_call_operand.hbm [shape: bf16[128,128], index: 6, kind: input, shape index: {}]
  %s7 = inlined_call_operand.vmem [shape: f32[1,128], index: 7, kind: input, shape index: {}]
  %s8 = inlined_call_operand.hbm [shape: bf16[128,128], index: 8, kind: input, shape index: {}]
  %s9 = inlined_call_operand.vmem [shape: f32[1,128], index: 9, kind: input, shape index: {}]
  %s10 = inlined_call_operand.hbm [shape: f32[1,8,128], index: 10, kind: output, shape index: {0}]
  %s11 = inlined_call_operand.hbm [shape: f32[8,128], index: 11, kind: output, shape index: {1}]
  %s12 = inlined_call_operand.hbm [shape: f32[8,128], index: 12, kind: output, shape index: {2}, may-alias: {1,12}]
  %13 = xla_tuple %s10, %s11, %s12
  %s14 = sld [smem:[#allocation0]]
  $region98: #{tpu_custom_call.1} parent=0
    _
  %s16 = ssub.s32 1, %s14
  %s17 = scalar_select 0, %s16, %s14
  $region1: #{tpu_custom_call.1} parent=0
    #allocation5 [shape = 'u8[4096]{0}', space=vmem, size = 0x1000, scoped, tag = 'input window, operand 1, single buffered']
    #allocation6 [shape = 's32[1]{0}', space=sflag, size = 0x4, scoped, tag = 'scoped memory for tpu_custom_call.1']
    #allocation7 [shape = 's32[1]{0}', space=sflag, size = 0x4, scoped, tag = 'scoped memory for tpu_custom_call.1']
    #allocation8 [shape = 'u8[262144]{0}', space=vmem, size = 0x40000, scoped, tag = 'input window, operand 3, single buffered']
    #allocation9 [shape = 's32[1]{0}', space=sflag, size = 0x4, scoped, tag = 'scoped memory for tpu_custom_call.1']
    #allocation10 [shape = 'u8[2048]{0}', space=vmem, size = 0x800, scoped, tag = 'input window, operand 4, single buffered']
    #allocation11 [shape = 'u8[32768]{0}', space=vmem, size = 0x8000, scoped, tag = 'input window, operand 5, single buffered']
    #allocation12 [shape = 's32[1]{0}', space=sflag, size = 0x4, scoped, tag = 'scoped memory for tpu_custom_call.1']
    #allocation13 [shape = 'u8[32768]{0}', space=vmem, size = 0x8000, scoped, tag = 'input window, operand 6, single buffered']
    #allocation14 [shape = 'u8[32768]{0}', space=vmem, size = 0x8000, scoped, tag = 'input window, operand 8, single buffered']
    #allocation15 [shape = 's32[1]{0}', space=sflag, size = 0x4, scoped, tag = 'scoped memory for tpu_custom_call.1']
    #allocation16 [shape = 'u8[4096]{0}', space=vmem, size = 0x1000, scoped, tag = 'output window, operand 0, single buffered']
    #allocation17 [shape = 'u8[4096]{0}', space=vmem, size = 0x1000, scoped, tag = 'output window, operand 1, single buffered']
    #allocation18 [shape = 's32[1]{0}', space=sflag, size = 0x4, scoped, tag = 'scoped memory for tpu_custom_call.1']
    #allocation19 [shape = 'u8[4096]{0}', space=vmem, size = 0x1000, scoped, tag = 'output window, operand 2, single buffered']
    %18 = vsyncpa [#allocation6], 0
    %19 = vsyncpa [#allocation9], 0
    %20 = vsyncpa [#allocation12], 0
    %21 = vsyncpa [#allocation15], 0
    %22 = vsyncpa [#allocation7], 0
    %23 = vsyncpa [#allocation18], 0
    // Predicated region
    $region2: #{tpu_custom_call.1} parent=1 // pred_check
      _
    $region3: #{tpu_custom_call.1} parent=1 // pred_check_branch
      %25 = sbr.rel (0) target = $region5
    $region4: #{tpu_custom_call.1} parent=1 // pred_region
      _
    $region5: #{tpu_custom_call.1} parent=1 // pred_fallthru
      _
    // Predicated region
    $region6: #{tpu_custom_call.1} parent=1 // pred_check
      _
    $region7: #{tpu_custom_call.1} parent=1 // pred_check_branch
      %27 = sbr.rel (0) target = $region9
    $region8: #{tpu_custom_call.1} parent=1 // pred_region
      %s29 = ssub.s32 128, 128
      %30 = vsyncadd [#allocation6], %s29
      %s32 = sshll.u32 [#allocation5], 4
      %s33 = int_to_ptr.vmem [resolvable:$true] %s32
      %35 = dma.hbm_to_vmem [thread:$0]  %s1, 128, %s33, [#allocation6]
    $region9: #{tpu_custom_call.1} parent=1 // pred_fallthru
      _
    // Predicated region
    $region10: #{tpu_custom_call.1} parent=1 // pred_check
      _
    $region11: #{tpu_custom_call.1} parent=1 // pred_check_branch
      %37 = sbr.rel (0) target = $region13
    $region12: #{tpu_custom_call.1} parent=1 // pred_region
      _
    $region13: #{tpu_custom_call.1} parent=1 // pred_fallthru
      _
    // Predicated region
    $region14: #{tpu_custom_call.1} parent=1 // pred_check
      _
    $region15: #{tpu_custom_call.1} parent=1 // pred_check_branch
      %39 = sbr.rel (0) target = $region17
    $region16: #{tpu_custom_call.1} parent=1 // pred_region
      %s41 = ssub.s32 8192, 8192
      %42 = vsyncadd [#allocation9], %s41
      %s43 = sshll.u32 [#allocation8], 4
      %s44 = int_to_ptr.vmem [resolvable:$true] %s43
      %49 = dma.hbm_to_vmem [thread:$0]  %s3, 8192, %s44, [#allocation9], 256, 256, 16
    $region17: #{tpu_custom_call.1} parent=1 // pred_fallthru
      _
    // Predicated region
    $region18: #{tpu_custom_call.1} parent=1 // pred_check
      _
    $region19: #{tpu_custom_call.1} parent=1 // pred_check_branch
      %51 = sbr.rel (0) target = $region21
    $region20: #{tpu_custom_call.1} parent=1 // pred_region
      %s53 = ssub.s32 64, 64
      %54 = vsyncadd [#allocation9], %s53
      %s56 = sshll.u32 [#allocation10], 4
      %s57 = int_to_ptr.vmem [resolvable:$true] %s56
      %59 = dma.hbm_to_vmem [thread:$0]  %s4, 64, %s57, [#allocation9]
    $region21: #{tpu_custom_call.1} parent=1 // pred_fallthru
      _
    // Predicated region
    $region22: #{tpu_custom_call.1} parent=1 // pred_check
      _
    $region23: #{tpu_custom_call.1} parent=1 // pred_check_branch
      %61 = sbr.rel (0) target = $region25
    $region24: #{tpu_custom_call.1} parent=1 // pred_region
      %s63 = ssub.s32 1024, 1024
      %64 = vsyncadd [#allocation12], %s63
      %s65 = sshll.u32 [#allocation11], 4
      %s66 = int_to_ptr.vmem [resolvable:$true] %s65
      %71 = dma.hbm_to_vmem [thread:$0]  %s5, 1024, %s66, [#allocation12], 64, 64, 4
    $region25: #{tpu_custom_call.1} parent=1 // pred_fallthru
      _
    // Predicated region
    $region26: #{tpu_custom_call.1} parent=1 // pred_check
      _
    $region27: #{tpu_custom_call.1} parent=1 // pred_check_branch
      %73 = sbr.rel (0) target = $region29
    $region28: #{tpu_custom_call.1} parent=1 // pred_region
      %s75 = ssub.s32 1024, 1024
      %76 = vsyncadd [#allocation12], %s75
      %s77 = sshll.u32 [#allocation13], 4
      %s78 = int_to_ptr.vmem [resolvable:$true] %s77
      %83 = dma.hbm_to_vmem [thread:$0]  %s6, 1024, %s78, [#allocation12], 64, 64, 4
    $region29: #{tpu_custom_call.1} parent=1 // pred_fallthru
      _
    // Predicated region
    $region30: #{tpu_custom_call.1} parent=1 // pred_check
      _
    $region31: #{tpu_custom_call.1} parent=1 // pred_check_branch
      %85 = sbr.rel (0) target = $region33
    $region32: #{tpu_custom_call.1} parent=1 // pred_region
      _
    $region33: #{tpu_custom_call.1} parent=1 // pred_fallthru
      _
    // Predicated region
    $region34: #{tpu_custom_call.1} parent=1 // pred_check
      _
    $region35: #{tpu_custom_call.1} parent=1 // pred_check_branch
      %87 = sbr.rel (0) target = $region37
    $region36: #{tpu_custom_call.1} parent=1 // pred_region
      %s89 = ssub.s32 1024, 1024
      %90 = vsyncadd [#allocation15], %s89
      %s91 = sshll.u32 [#allocation14], 4
      %s92 = int_to_ptr.vmem [resolvable:$true] %s91
      %97 = dma.hbm_to_vmem [thread:$0]  %s8, 1024, %s92, [#allocation15], 64, 64, 4
    $region37: #{tpu_custom_call.1} parent=1 // pred_fallthru
      _
    // Predicated region
    $region38: #{tpu_custom_call.1} parent=1 // pred_check
      _
    $region39: #{tpu_custom_call.1} parent=1 // pred_check_branch
      %99 = sbr.rel (0) target = $region41
    $region40: #{tpu_custom_call.1} parent=1 // pred_region
      _
    $region41: #{tpu_custom_call.1} parent=1 // pred_fallthru
      _
    // Predicated region
    $region42: #{tpu_custom_call.1} parent=1 // pred_check
      _
    $region43: #{tpu_custom_call.1} parent=1 // pred_check_branch
      %101 = sbr.rel (0) target = $region45
    $region44: #{tpu_custom_call.1} parent=1 // pred_region
      %102 = dma.done [#allocation6], 128
    $region45: #{tpu_custom_call.1} parent=1 // pred_fallthru
      _
    // Predicated region
    $region46: #{tpu_custom_call.1} parent=1 // pred_check
      _
    $region47: #{tpu_custom_call.1} parent=1 // pred_check_branch
      %104 = sbr.rel (0) target = $region49
    $region48: #{tpu_custom_call.1} parent=1 // pred_region
      %105 = dma.done [#allocation9], 8192
    $region49: #{tpu_custom_call.1} parent=1 // pred_fallthru
      _
    // Predicated region
    $region50: #{tpu_custom_call.1} parent=1 // pred_check
      _
    $region51: #{tpu_custom_call.1} parent=1 // pred_check_branch
      %107 = sbr.rel (0) target = $region53
    $region52: #{tpu_custom_call.1} parent=1 // pred_region
      %108 = dma.done [#allocation9], 64
    $region53: #{tpu_custom_call.1} parent=1 // pred_fallthru
      _
    // Predicated region
    $region54: #{tpu_custom_call.1} parent=1 // pred_check
      _
    $region55: #{tpu_custom_call.1} parent=1 // pred_check_branch
      %110 = sbr.rel (0) target = $region57
    $region56: #{tpu_custom_call.1} parent=1 // pred_region
      %111 = dma.done [#allocation12], 1024
    $region57: #{tpu_custom_call.1} parent=1 // pred_fallthru
      _
    // Predicated region
    $region58: #{tpu_custom_call.1} parent=1 // pred_check
      _
    $region59: #{tpu_custom_call.1} parent=1 // pred_check_branch
      %113 = sbr.rel (0) target = $region61
    $region60: #{tpu_custom_call.1} parent=1 // pred_region
      %114 = dma.done [#allocation12], 1024
    $region61: #{tpu_custom_call.1} parent=1 // pred_fallthru
      _
    // Predicated region
    $region62: #{tpu_custom_call.1} parent=1 // pred_check
      _
    $region63: #{tpu_custom_call.1} parent=1 // pred_check_branch
      %116 = sbr.rel (0) target = $region65
    $region64: #{tpu_custom_call.1} parent=1 // pred_region
      %117 = dma.done [#allocation15], 1024
    $region65: #{tpu_custom_call.1} parent=1 // pred_fallthru
      _
    %p119 = scmp.eq.s32.totalorder 0, 0
    // Predicated region
    $region66: #{tpu_custom_call.1} parent=1 // pred_check
      %p120 = pneg %p119
    $region67: #{tpu_custom_call.1} parent=1 // pred_check_branch
      %122 = sbr.rel (%p120) target = $region69
    $region68: #{tpu_custom_call.1} parent=1 // pred_region
      %v123 = vld [vmem:[%s0] sm:$0xff]
      %v124 = vld [vmem:[%s0 + $0x8] sm:$0xff]
      %v125 = vpack.c.bf16 %v123, %v123
      %v126 = vpack.c.bf16 %v124, %v124
      %v127 = vld [vmem:[#allocation8] sm:$0xff]
      %v128 = vld [vmem:[#allocation8 + $0x8] sm:$0xff]
      %v129 = vld [vmem:[#allocation8 + $0x10] sm:$0xff]
      %v130 = vld [vmem:[#allocation8 + $0x18] sm:$0xff]
      %v131 = vld [vmem:[#allocation8 + $0x20] sm:$0xff]
      %v132 = vld [vmem:[#allocation8 + $0x28] sm:$0xff]
      %v133 = vld [vmem:[#allocation8 + $0x30] sm:$0xff]
      %v134 = vld [vmem:[#allocation8 + $0x38] sm:$0xff]
      %v135 = vld [vmem:[#allocation8 + $0x40] sm:$0xff]
      %v136 = vld [vmem:[#allocation8 + $0x48] sm:$0xff]
      %v137 = vld [vmem:[#allocation8 + $0x50] sm:$0xff]
      %v138 = vld [vmem:[#allocation8 + $0x58] sm:$0xff]
      %v139 = vld [vmem:[#allocation8 + $0x60] sm:$0xff]
      %v140 = vld [vmem:[#allocation8 + $0x68] sm:$0xff]
      %v141 = vld [vmem:[#allocation8 + $0x70] sm:$0xff]
      %v142 = vld [vmem:[#allocation8 + $0x78] sm:$0xff]
      %v143 = vld [vmem:[#allocation8 + $0x80] sm:$0xff]
      %v144 = vld [vmem:[#allocation8 + $0x88] sm:$0xff]
      %v145 = vld [vmem:[#allocation8 + $0x90] sm:$0xff]
      %v146 = vld [vmem:[#allocation8 + $0x98] sm:$0xff]
      %v147 = vld [vmem:[#allocation8 + $0xa0] sm:$0xff]
      %v148 = vld [vmem:[#allocation8 + $0xa8] sm:$0xff]
      %v149 = vld [vmem:[#allocation8 + $0xb0] sm:$0xff]
      %v150 = vld [vmem:[#allocation8 + $0xb8] sm:$0xff]
      %v151 = vld [vmem:[#allocation8 + $0xc0] sm:$0xff]
      %v152 = vld [vmem:[#allocation8 + $0xc8] sm:$0xff]
      %v153 = vld [vmem:[#allocation8 + $0xd0] sm:$0xff]
      %v154 = vld [vmem:[#allocation8 + $0xd8] sm:$0xff]
      %v155 = vld [vmem:[#allocation8 + $0xe0] sm:$0xff]
      %v156 = vld [vmem:[#allocation8 + $0xe8] sm:$0xff]
      %v157 = vld [vmem:[#allocation8 + $0xf0] sm:$0xff]
      %v158 = vld [vmem:[#allocation8 + $0xf8] sm:$0xff]
      %v159 = vld [vmem:[#allocation8 + $0x100] sm:$0xff]
      %v160 = vld [vmem:[#allocation8 + $0x108] sm:$0xff]
      %v161 = vld [vmem:[#allocation8 + $0x110] sm:$0xff]
      %v162 = vld [vmem:[#allocation8 + $0x118] sm:$0xff]
      %v163 = vld [vmem:[#allocation8 + $0x120] sm:$0xff]
      %v164 = vld [vmem:[#allocation8 + $0x128] sm:$0xff]
      %v165 = vld [vmem:[#allocation8 + $0x130] sm:$0xff]
      %v166 = vld [vmem:[#allocation8 + $0x138] sm:$0xff]
      %v167 = vld [vmem:[#allocation8 + $0x140] sm:$0xff]
      %v168 = vld [vmem:[#allocation8 + $0x148] sm:$0xff]
      %v169 = vld [vmem:[#allocation8 + $0x150] sm:$0xff]
      %v170 = vld [vmem:[#allocation8 + $0x158] sm:$0xff]
      %v171 = vld [vmem:[#allocation8 + $0x160] sm:$0xff]
      %v172 = vld [vmem:[#allocation8 + $0x168] sm:$0xff]
      %v173 = vld [vmem:[#allocation8 + $0x170] sm:$0xff]
      %v174 = vld [vmem:[#allocation8 + $0x178] sm:$0xff]
      %v175 = vld [vmem:[#allocation8 + $0x180] sm:$0xff]
      %v176 = vld [vmem:[#allocation8 + $0x188] sm:$0xff]
      %v177 = vld [vmem:[#allocation8 + $0x190] sm:$0xff]
      %v178 = vld [vmem:[#allocation8 + $0x198] sm:$0xff]
      %v179 = vld [vmem:[#allocation8 + $0x1a0] sm:$0xff]
      %v180 = vld [vmem:[#allocation8 + $0x1a8] sm:$0xff]
      %v181 = vld [vmem:[#allocation8 + $0x1b0] sm:$0xff]
      %v182 = vld [vmem:[#allocation8 + $0x1b8] sm:$0xff]
      %v183 = vld [vmem:[#allocation8 + $0x1c0] sm:$0xff]
      %v184 = vld [vmem:[#allocation8 + $0x1c8] sm:$0xff]
      %v185 = vld [vmem:[#allocation8 + $0x1d0] sm:$0xff]
      %v186 = vld [vmem:[#allocation8 + $0x1d8] sm:$0xff]
      %v187 = vld [vmem:[#allocation8 + $0x1e0] sm:$0xff]
      %v188 = vld [vmem:[#allocation8 + $0x1e8] sm:$0xff]
      %v189 = vld [vmem:[#allocation8 + $0x1f0] sm:$0xff]
      %v190 = vld [vmem:[#allocation8 + $0x1f8] sm:$0xff]
      %v191 = vld [vmem:[#allocation10] sm:$0xf]
      %v193 = vlaneseq
      %v194 = vshrl.u32 %v193, 7
      %v195 = vsub.s32 0, %v194
      %v196 = vrot.slane %v191, %v195
      %v197 = vlaneseq
      %v198 = vshrl.u32 %v197, 7
      %v199 = vsub.s32 1, %v198
      %v200 = vrot.slane %v191, %v199
      %v201 = vlaneseq
      %v202 = vshrl.u32 %v201, 7
      %v203 = vsub.s32 2, %v202
      %v204 = vrot.slane %v191, %v203
      %v205 = vlaneseq
      %v206 = vshrl.u32 %v205, 7
      %v207 = vsub.s32 3, %v206
      %v208 = vrot.slane %v191, %v207
      %v277 = vunpack.c.l.b16 %v127
      %v278 = vunpack.c.h.b16 %v127
      %v279 = vunpack.c.l.b16 %v128
      %v280 = vunpack.c.h.b16 %v128
      %v281 = vunpack.c.l.b16 %v129
      %v282 = vunpack.c.h.b16 %v129
      %v283 = vunpack.c.l.b16 %v130
      %v284 = vunpack.c.h.b16 %v130
      %v285 = vunpack.c.l.b16 %v131
      %v286 = vunpack.c.h.b16 %v131
      %v287 = vunpack.c.l.b16 %v132
      %v288 = vunpack.c.h.b16 %v132
      %v289 = vunpack.c.l.b16 %v133
      %v290 = vunpack.c.h.b16 %v133
      %v291 = vunpack.c.l.b16 %v134
      %v292 = vunpack.c.h.b16 %v134
      %v293 = vunpack.c.l.b16 %v135
      %v294 = vunpack.c.h.b16 %v135
      %v295 = vunpack.c.l.b16 %v136
      %v296 = vunpack.c.h.b16 %v136
      %v297 = vunpack.c.l.b16 %v137
      %v298 = vunpack.c.h.b16 %v137
      %v299 = vunpack.c.l.b16 %v138
      %v300 = vunpack.c.h.b16 %v138
      %v301 = vunpack.c.l.b16 %v139
      %v302 = vunpack.c.h.b16 %v139
      %v303 = vunpack.c.l.b16 %v140
      %v304 = vunpack.c.h.b16 %v140
      %v305 = vunpack.c.l.b16 %v141
      %v306 = vunpack.c.h.b16 %v141
      %v307 = vunpack.c.l.b16 %v142
      %v308 = vunpack.c.h.b16 %v142
      %v309 = vunpack.c.l.b16 %v143
      %v310 = vunpack.c.h.b16 %v143
      %v311 = vunpack.c.l.b16 %v144
      %v312 = vunpack.c.h.b16 %v144
      %v313 = vunpack.c.l.b16 %v145
      %v314 = vunpack.c.h.b16 %v145
      %v315 = vunpack.c.l.b16 %v146
      %v316 = vunpack.c.h.b16 %v146
      %v317 = vunpack.c.l.b16 %v147
      %v318 = vunpack.c.h.b16 %v147
      %v319 = vunpack.c.l.b16 %v148
      %v320 = vunpack.c.h.b16 %v148
      %v321 = vunpack.c.l.b16 %v149
      %v322 = vunpack.c.h.b16 %v149
      %v323 = vunpack.c.l.b16 %v150
      %v324 = vunpack.c.h.b16 %v150
      %v325 = vunpack.c.l.b16 %v151
      %v326 = vunpack.c.h.b16 %v151
      %v327 = vunpack.c.l.b16 %v152
      %v328 = vunpack.c.h.b16 %v152
      %v329 = vunpack.c.l.b16 %v153
      %v330 = vunpack.c.h.b16 %v153
      %v331 = vunpack.c.l.b16 %v154
      %v332 = vunpack.c.h.b16 %v154
      %v333 = vunpack.c.l.b16 %v155
      %v334 = vunpack.c.h.b16 %v155
      %v335 = vunpack.c.l.b16 %v156
      %v336 = vunpack.c.h.b16 %v156
      %v337 = vunpack.c.l.b16 %v157
      %v338 = vunpack.c.h.b16 %v157
      %v339 = vunpack.c.l.b16 %v158
      %v340 = vunpack.c.h.b16 %v158
      %v341 = vunpack.c.l.b16 %v159
      %v342 = vunpack.c.h.b16 %v159
      %v343 = vunpack.c.l.b16 %v160
      %v344 = vunpack.c.h.b16 %v160
      %v345 = vunpack.c.l.b16 %v161
      %v346 = vunpack.c.h.b16 %v161
      %v347 = vunpack.c.l.b16 %v162
      %v348 = vunpack.c.h.b16 %v162
      %v349 = vunpack.c.l.b16 %v163
      %v350 = vunpack.c.h.b16 %v163
      %v351 = vunpack.c.l.b16 %v164
      %v352 = vunpack.c.h.b16 %v164
      %v353 = vunpack.c.l.b16 %v165
      %v354 = vunpack.c.h.b16 %v165
      %v355 = vunpack.c.l.b16 %v166
      %v356 = vunpack.c.h.b16 %v166
      %v357 = vunpack.c.l.b16 %v167
      %v358 = vunpack.c.h.b16 %v167
      %v359 = vunpack.c.l.b16 %v168
      %v360 = vunpack.c.h.b16 %v168
      %v361 = vunpack.c.l.b16 %v169
      %v362 = vunpack.c.h.b16 %v169
      %v363 = vunpack.c.l.b16 %v170
      %v364 = vunpack.c.h.b16 %v170
      %v365 = vunpack.c.l.b16 %v171
      %v366 = vunpack.c.h.b16 %v171
      %v367 = vunpack.c.l.b16 %v172
      %v368 = vunpack.c.h.b16 %v172
      %v369 = vunpack.c.l.b16 %v173
      %v370 = vunpack.c.h.b16 %v173
      %v371 = vunpack.c.l.b16 %v174
      %v372 = vunpack.c.h.b16 %v174
      %v373 = vunpack.c.l.b16 %v175
      %v374 = vunpack.c.h.b16 %v175
      %v375 = vunpack.c.l.b16 %v176
      %v376 = vunpack.c.h.b16 %v176
      %v377 = vunpack.c.l.b16 %v177
      %v378 = vunpack.c.h.b16 %v177
      %v379 = vunpack.c.l.b16 %v178
      %v380 = vunpack.c.h.b16 %v178
      %v381 = vunpack.c.l.b16 %v179
      %v382 = vunpack.c.h.b16 %v179
      %v383 = vunpack.c.l.b16 %v180
      %v384 = vunpack.c.h.b16 %v180
      %v385 = vunpack.c.l.b16 %v181
      %v386 = vunpack.c.h.b16 %v181
      %v387 = vunpack.c.l.b16 %v182
      %v388 = vunpack.c.h.b16 %v182
      %v389 = vunpack.c.l.b16 %v183
      %v390 = vunpack.c.h.b16 %v183
      %v391 = vunpack.c.l.b16 %v184
      %v392 = vunpack.c.h.b16 %v184
      %v393 = vunpack.c.l.b16 %v185
      %v394 = vunpack.c.h.b16 %v185
      %v395 = vunpack.c.l.b16 %v186
      %v396 = vunpack.c.h.b16 %v186
      %v397 = vunpack.c.l.b16 %v187
      %v398 = vunpack.c.h.b16 %v187
      %v399 = vunpack.c.l.b16 %v188
      %v400 = vunpack.c.h.b16 %v188
      %v401 = vunpack.c.l.b16 %v189
      %v402 = vunpack.c.h.b16 %v189
      %v403 = vunpack.c.l.b16 %v190
      %v404 = vunpack.c.h.b16 %v190
      %v405 = vpack.c.b16 %v281, %v277
      %v406 = vpack.c.b16 %v282, %v278
      %v407 = vpack.c.b16 %v283, %v279
      %v408 = vpack.c.b16 %v284, %v280
      %v409 = vpack.c.b16 %v289, %v285
      %v410 = vpack.c.b16 %v290, %v286
      %v411 = vpack.c.b16 %v291, %v287
      %v412 = vpack.c.b16 %v292, %v288
      %v413 = vpack.c.b16 %v297, %v293
      %v414 = vpack.c.b16 %v298, %v294
      %v415 = vpack.c.b16 %v299, %v295
      %v416 = vpack.c.b16 %v300, %v296
      %v417 = vpack.c.b16 %v305, %v301
      %v418 = vpack.c.b16 %v306, %v302
      %v419 = vpack.c.b16 %v307, %v303
      %v420 = vpack.c.b16 %v308, %v304
      %v421 = vpack.c.b16 %v313, %v309
      %v422 = vpack.c.b16 %v314, %v310
      %v423 = vpack.c.b16 %v315, %v311
      %v424 = vpack.c.b16 %v316, %v312
      %v425 = vpack.c.b16 %v321, %v317
      %v426 = vpack.c.b16 %v322, %v318
      %v427 = vpack.c.b16 %v323, %v319
      %v428 = vpack.c.b16 %v324, %v320
      %v429 = vpack.c.b16 %v329, %v325
      %v430 = vpack.c.b16 %v330, %v326
      %v431 = vpack.c.b16 %v331, %v327
      %v432 = vpack.c.b16 %v332, %v328
      %v433 = vpack.c.b16 %v337, %v333
      %v434 = vpack.c.b16 %v338, %v334
      %v435 = vpack.c.b16 %v339, %v335
      %v436 = vpack.c.b16 %v340, %v336
      %v437 = vpack.c.b16 %v345, %v341
      %v438 = vpack.c.b16 %v346, %v342
      %v439 = vpack.c.b16 %v347, %v343
      %v440 = vpack.c.b16 %v348, %v344
      %v441 = vpack.c.b16 %v353, %v349
      %v442 = vpack.c.b16 %v354, %v350
      %v443 = vpack.c.b16 %v355, %v351
      %v444 = vpack.c.b16 %v356, %v352
      %v445 = vpack.c.b16 %v361, %v357
      %v446 = vpack.c.b16 %v362, %v358
      %v447 = vpack.c.b16 %v363, %v359
      %v448 = vpack.c.b16 %v364, %v360
      %v449 = vpack.c.b16 %v369, %v365
      %v450 = vpack.c.b16 %v370, %v366
      %v451 = vpack.c.b16 %v371, %v367
      %v452 = vpack.c.b16 %v372, %v368
      %v453 = vpack.c.b16 %v377, %v373
      %v454 = vpack.c.b16 %v378, %v374
      %v455 = vpack.c.b16 %v379, %v375
      %v456 = vpack.c.b16 %v380, %v376
      %v457 = vpack.c.b16 %v385, %v381
      %v458 = vpack.c.b16 %v386, %v382
      %v459 = vpack.c.b16 %v387, %v383
      %v460 = vpack.c.b16 %v388, %v384
      %v461 = vpack.c.b16 %v393, %v389
      %v462 = vpack.c.b16 %v394, %v390
      %v463 = vpack.c.b16 %v395, %v391
      %v464 = vpack.c.b16 %v396, %v392
      %v465 = vpack.c.b16 %v401, %v397
      %v466 = vpack.c.b16 %v402, %v398
      %v467 = vpack.c.b16 %v403, %v399
      %v468 = vpack.c.b16 %v404, %v400
      %533 = vmatprep.subr.bf16.mxu0 %v406
      %534 = vmatpush1.bf16.msra.mxu0 %v405
      %535 = vmatprep.subr.bf16.mxu0 %v410
      %536 = vmatpush1.bf16.msra.mxu0 %v409
      %537 = vmatprep.subr.bf16.mxu0 %v414
      %538 = vmatpush1.bf16.msra.mxu0 %v413
      %539 = vmatprep.subr.bf16.mxu0 %v418
      %540 = vmatpush1.bf16.msra.mxu0 %v417
      %541 = vmatprep.subr.bf16.mxu0 %v422
      %542 = vmatpush1.bf16.msra.mxu0 %v421
      %543 = vmatprep.subr.bf16.mxu0 %v426
      %544 = vmatpush1.bf16.msra.mxu0 %v425
      %545 = vmatprep.subr.bf16.mxu0 %v430
      %546 = vmatpush1.bf16.msra.mxu0 %v429
      %547 = vmatprep.subr.bf16.mxu0 %v434
      %548 = vmatpush1.bf16.msra.mxu0 %v433
      %549 = vmatprep.subr.bf16.mxu0 %v438
      %550 = vmatpush1.bf16.msra.mxu0 %v437
      %551 = vmatprep.subr.bf16.mxu0 %v442
      %552 = vmatpush1.bf16.msra.mxu0 %v441
      %553 = vmatprep.subr.bf16.mxu0 %v446
      %554 = vmatpush1.bf16.msra.mxu0 %v445
      %555 = vmatprep.subr.bf16.mxu0 %v450
      %556 = vmatpush1.bf16.msra.mxu0 %v449
      %557 = vmatprep.subr.bf16.mxu0 %v454
      %558 = vmatpush1.bf16.msra.mxu0 %v453
      %559 = vmatprep.subr.bf16.mxu0 %v458
      %560 = vmatpush1.bf16.msra.mxu0 %v457
      %561 = vmatprep.subr.bf16.mxu0 %v462
      %562 = vmatpush1.bf16.msra.mxu0 %v461
      %563 = vmatprep.subr.bf16.mxu0 %v466
      %564 = vmatpush1.bf16.msra.mxu0 %v465
      %565 = vmatprep.mubr.bf16.mxu0 %v126
      %566 = vmatmul.mubr.bf16.gmra.mrb[0].mxu0 %v125
      %v567 = vpop.f32.mrb[0].mxu0
      %v568 = vadd.f32 %v196, %v567
      %v569 = vpop.f32.mrb[0].mxu0
      %v570 = vadd.f32 %v200, %v569
      %v571 = vpop.f32.mrb[0].mxu0
      %v572 = vpop.f32.mrb[0].mxu0
      %573 = vdwg.mxu0
      %574 = vmatprep.subr.bf16.mxu0 %v408
      %575 = vmatpush1.bf16.msra.mxu0 %v407
      %576 = vmatprep.subr.bf16.mxu0 %v412
      %577 = vmatpush1.bf16.msra.mxu0 %v411
      %578 = vmatprep.subr.bf16.mxu0 %v416
      %579 = vmatpush1.bf16.msra.mxu0 %v415
      %580 = vmatprep.subr.bf16.mxu0 %v420
      %581 = vmatpush1.bf16.msra.mxu0 %v419
      %582 = vmatprep.subr.bf16.mxu0 %v424
      %583 = vmatpush1.bf16.msra.mxu0 %v423
      %584 = vmatprep.subr.bf16.mxu0 %v428
      %585 = vmatpush1.bf16.msra.mxu0 %v427
      %586 = vmatprep.subr.bf16.mxu0 %v432
      %587 = vmatpush1.bf16.msra.mxu0 %v431
      %588 = vmatprep.subr.bf16.mxu0 %v436
      %589 = vmatpush1.bf16.msra.mxu0 %v435
      %590 = vmatprep.subr.bf16.mxu0 %v440
      %591 = vmatpush1.bf16.msra.mxu0 %v439
      %592 = vmatprep.subr.bf16.mxu0 %v444
      %593 = vmatpush1.bf16.msra.mxu0 %v443
      %594 = vmatprep.subr.bf16.mxu0 %v448
      %595 = vmatpush1.bf16.msra.mxu0 %v447
      %596 = vmatprep.subr.bf16.mxu0 %v452
      %597 = vmatpush1.bf16.msra.mxu0 %v451
      %598 = vmatprep.subr.bf16.mxu0 %v456
      %599 = vmatpush1.bf16.msra.mxu0 %v455
      %600 = vmatprep.subr.bf16.mxu0 %v460
      %601 = vmatpush1.bf16.msra.mxu0 %v459
      %602 = vmatprep.subr.bf16.mxu0 %v464
      %603 = vmatpush1.bf16.msra.mxu0 %v463
      %604 = vmatprep.subr.bf16.mxu0 %v468
      %605 = vmatpush1.bf16.msra.mxu0 %v467
      %606 = vmatprep.mubr.bf16.mxu0 %v126
      %607 = vmatmul.mubr.bf16.gmra.mrb[0].mxu0 %v125
      %v608 = vpop.f32.mrb[0].mxu0
      %v609 = vadd.f32 %v204, %v608
      %v610 = vpop.f32.mrb[0].mxu0
      %v611 = vadd.f32 %v208, %v610
      %v612 = vpop.f32.mrb[0].mxu0
      %v613 = vpop.f32.mrb[0].mxu0
      %614 = vdwg.mxu0
      %v615 = vxor.u32 %v568, 2147483648
      %v616 = vmul.f32 %v615, 1.442695
      %v617 = vpow.pop %v616
      %v618 = vadd.f32 %v617, 1.0
      %v619 = vrcp.pop %v618
      %v620 = vmul.f32 1.0, %v619
      %v621 = vxor.u32 %v570, 2147483648
      %v622 = vmul.f32 %v621, 1.442695
      %v623 = vpow.pop %v622
      %v624 = vadd.f32 %v623, 1.0
      %v625 = vrcp.pop %v624
      %v626 = vmul.f32 1.0, %v625
      %v627 = vtanh.pop %v609
      %v628 = vxor.u32 %v611, 2147483648
      %v629 = vmul.f32 %v628, 1.442695
      %v630 = vpow.pop %v629
      %v631 = vadd.f32 %v630, 1.0
      %v632 = vrcp.pop %v631
      %v633 = vmul.f32 1.0, %v632
      %v634 = vld [vmem:[#allocation5] sm:$0xff]
      %v635 = vmul.f32 %v626, %v634
      %v636 = vmul.f32 %v620, %v627
      %v637 = vadd.f32 %v635, %v636
      %v638 = vtanh.pop %v637
      %v639 = vmul.f32 %v633, %v638
      %v640 = vld [vmem:[%s2] sm:$0xf]
      %v641 = vld [vmem:[%s2 + $0x4] sm:$0xf]
      %v642 = vld [vmem:[%s2 + $0x8] sm:$0xf]
      %v643 = vld [vmem:[%s2 + $0xc] sm:$0xf]
      %v644 = vld [vmem:[%s2 + $0x10] sm:$0xf]
      %v645 = vld [vmem:[%s2 + $0x14] sm:$0xf]
      %v646 = vld [vmem:[%s2 + $0x18] sm:$0xf]
      %v647 = vld [vmem:[%s2 + $0x1c] sm:$0xf]
      %v648 = vpack.c.bf16 %v639, %v639
      %v651 = vunpack.c.l.s4 1966171168
      %v652 = vunpack.c.0.s8 %v651
      %v653 = vlaneseq
      %v654 = vshrl.u32 %v653, 7
      %v655 = vsub.s32 %v652, %v654
      %v656 = vrot.slane %v648, %v655
      %v657 = vcombine.high %v656, %v656
      %v659 = vunpack.c.l.s4 1966171168
      %v660 = vunpack.c.0.s8 %v659
      %v661 = vlaneseq
      %v662 = vshrl.u32 %v661, 7
      %v663 = vsub.s32 %v660, %v662
      %v664 = vrot.slane %v656, %v663
      %v666 = vunpack.c.l.s4 1966171168
      %v667 = vunpack.c.0.s8 %v666
      %v668 = vlaneseq
      %v669 = vshrl.u32 %v668, 7
      %v670 = vsub.s32 %v667, %v669
      %v671 = vrot.slane %v657, %v670
      %v672 = vcombine.high %v664, %v664
      %v673 = vcombine.high %v671, %v671
      %v674 = vunpack.i.l.s16 %v664
      %v675 = vunpack.i.h.s16 %v664
      %v676 = vunpack.i.l.s16 %v671
      %v677 = vunpack.i.h.s16 %v671
      %v678 = vunpack.i.l.s16 %v672
      %v679 = vunpack.i.h.s16 %v672
      %v680 = vunpack.i.l.s16 %v673
      %v681 = vunpack.i.h.s16 %v673
      %v682 = vpack.i.b16 %v674, %v674
      %v683 = vlaneseq
      %v684 = vshrl.u32 %v683, 7
      %v685 = vsub.s32 0, %v684
      %v686 = vrot.slane %v682, %v685
      %688 = vmatprep.subr.bf16.mxu0 0
      %689 = vmatpush1.bf16.xpose.msra.mxu0 %v640
      %690 = vmatprep.subr.bf16.mxu0 0
      %691 = vmatpush1.bf16.xpose.msra.mxu0 0
      %692 = vmatprep.subr.bf16.mxu0 0
      %693 = vmatpush1.bf16.xpose.msra.mxu0 0
      %694 = vmatprep.subr.bf16.mxu0 0
      %695 = vmatpush1.bf16.xpose.msra.mxu0 0
      %696 = vmatprep.subr.bf16.mxu0 0
      %697 = vmatpush1.bf16.xpose.msra.mxu0 0
      %698 = vmatprep.subr.bf16.mxu0 0
      %699 = vmatpush1.bf16.xpose.msra.mxu0 0
      %700 = vmatprep.subr.bf16.mxu0 0
      %701 = vmatpush1.bf16.xpose.msra.mxu0 0
      %702 = vmatprep.subr.bf16.mxu0 0
      %703 = vmatpush1.bf16.xpose.msra.mxu0 0
      %704 = vmatprep.subr.bf16.mxu0 0
      %705 = vmatpush1.bf16.xpose.msra.mxu0 0
      %706 = vmatprep.subr.bf16.mxu0 0
      %707 = vmatpush1.bf16.xpose.msra.mxu0 0
      %708 = vmatprep.subr.bf16.mxu0 0
      %709 = vmatpush1.bf16.xpose.msra.mxu0 0
      %710 = vmatprep.subr.bf16.mxu0 0
      %711 = vmatpush1.bf16.xpose.msra.mxu0 0
      %712 = vmatprep.subr.bf16.mxu0 0
      %713 = vmatpush1.bf16.xpose.msra.mxu0 0
      %714 = vmatprep.subr.bf16.mxu0 0
      %715 = vmatpush1.bf16.xpose.msra.mxu0 0
      %716 = vmatprep.subr.bf16.mxu0 0
      %717 = vmatpush1.bf16.xpose.msra.mxu0 0
      %718 = vmatprep.subr.bf16.mxu0 0
      %719 = vmatpush1.bf16.xpose.msra.mxu0 0
      %720 = vmatprep.mubr.bf16.mxu0 0
      %721 = vmatmul.mubr.bf16.gmra.mrb[0].mxu0 %v686
      %v722 = vpop.f32.mrb[0].mxu0
      %v723 = vadd.f32 0.0, %v722
      %v724 = vpop.f32.mrb[0].mxu0
      %v725 = vpop.f32.mrb[0].mxu0
      %v726 = vpop.f32.mrb[0].mxu0
      %727 = vdwg.mxu0
      %v728 = vpack.i.b16 %v675, %v675
      %v729 = vlaneseq
      %v730 = vshrl.u32 %v729, 7
      %v731 = vsub.s32 0, %v730
      %v732 = vrot.slane %v728, %v731
      %734 = vmatprep.subr.bf16.mxu0 0
      %735 = vmatpush1.bf16.xpose.msra.mxu0 %v641
      %736 = vmatprep.subr.bf16.mxu0 0
      %737 = vmatpush1.bf16.xpose.msra.mxu0 0
      %738 = vmatprep.subr.bf16.mxu0 0
      %739 = vmatpush1.bf16.xpose.msra.mxu0 0
      %740 = vmatprep.subr.bf16.mxu0 0
      %741 = vmatpush1.bf16.xpose.msra.mxu0 0
      %742 = vmatprep.subr.bf16.mxu0 0
      %743 = vmatpush1.bf16.xpose.msra.mxu0 0
      %744 = vmatprep.subr.bf16.mxu0 0
      %745 = vmatpush1.bf16.xpose.msra.mxu0 0
      %746 = vmatprep.subr.bf16.mxu0 0
      %747 = vmatpush1.bf16.xpose.msra.mxu0 0
      %748 = vmatprep.subr.bf16.mxu0 0
      %749 = vmatpush1.bf16.xpose.msra.mxu0 0
      %750 = vmatprep.subr.bf16.mxu0 0
      %751 = vmatpush1.bf16.xpose.msra.mxu0 0
      %752 = vmatprep.subr.bf16.mxu0 0
      %753 = vmatpush1.bf16.xpose.msra.mxu0 0
      %754 = vmatprep.subr.bf16.mxu0 0
      %755 = vmatpush1.bf16.xpose.msra.mxu0 0
      %756 = vmatprep.subr.bf16.mxu0 0
      %757 = vmatpush1.bf16.xpose.msra.mxu0 0
      %758 = vmatprep.subr.bf16.mxu0 0
      %759 = vmatpush1.bf16.xpose.msra.mxu0 0
      %760 = vmatprep.subr.bf16.mxu0 0
      %761 = vmatpush1.bf16.xpose.msra.mxu0 0
      %762 = vmatprep.subr.bf16.mxu0 0
      %763 = vmatpush1.bf16.xpose.msra.mxu0 0
      %764 = vmatprep.subr.bf16.mxu0 0
      %765 = vmatpush1.bf16.xpose.msra.mxu0 0
      %766 = vmatprep.mubr.bf16.mxu0 0
      %767 = vmatmul.mubr.bf16.gmra.mrb[0].mxu0 %v732
      %v768 = vpop.f32.mrb[0].mxu0
      %v769 = vadd.f32 0.0, %v768
      %v770 = vpop.f32.mrb[0].mxu0
      %v771 = vpop.f32.mrb[0].mxu0
      %v772 = vpop.f32.mrb[0].mxu0
      %773 = vdwg.mxu0
      %v774 = vpack.i.b16 %v676, %v676
      %v775 = vlaneseq
      %v776 = vshrl.u32 %v775, 7
      %v777 = vsub.s32 0, %v776
      %v778 = vrot.slane %v774, %v777
      %780 = vmatprep.subr.bf16.mxu0 0
      %781 = vmatpush1.bf16.xpose.msra.mxu0 %v642
      %782 = vmatprep.subr.bf16.mxu0 0
      %783 = vmatpush1.bf16.xpose.msra.mxu0 0
      %784 = vmatprep.subr.bf16.mxu0 0
      %785 = vmatpush1.bf16.xpose.msra.mxu0 0
      %786 = vmatprep.subr.bf16.mxu0 0
      %787 = vmatpush1.bf16.xpose.msra.mxu0 0
      %788 = vmatprep.subr.bf16.mxu0 0
      %789 = vmatpush1.bf16.xpose.msra.mxu0 0
      %790 = vmatprep.subr.bf16.mxu0 0
      %791 = vmatpush1.bf16.xpose.msra.mxu0 0
      %792 = vmatprep.subr.bf16.mxu0 0
      %793 = vmatpush1.bf16.xpose.msra.mxu0 0
      %794 = vmatprep.subr.bf16.mxu0 0
      %795 = vmatpush1.bf16.xpose.msra.mxu0 0
      %796 = vmatprep.subr.bf16.mxu0 0
      %797 = vmatpush1.bf16.xpose.msra.mxu0 0
      %798 = vmatprep.subr.bf16.mxu0 0
      %799 = vmatpush1.bf16.xpose.msra.mxu0 0
      %800 = vmatprep.subr.bf16.mxu0 0
      %801 = vmatpush1.bf16.xpose.msra.mxu0 0
      %802 = vmatprep.subr.bf16.mxu0 0
      %803 = vmatpush1.bf16.xpose.msra.mxu0 0
      %804 = vmatprep.subr.bf16.mxu0 0
      %805 = vmatpush1.bf16.xpose.msra.mxu0 0
      %806 = vmatprep.subr.bf16.mxu0 0
      %807 = vmatpush1.bf16.xpose.msra.mxu0 0
      %808 = vmatprep.subr.bf16.mxu0 0
      %809 = vmatpush1.bf16.xpose.msra.mxu0 0
      %810 = vmatprep.subr.bf16.mxu0 0
      %811 = vmatpush1.bf16.xpose.msra.mxu0 0
      %812 = vmatprep.mubr.bf16.mxu0 0
      %813 = vmatmul.mubr.bf16.gmra.mrb[0].mxu0 %v778
      %v814 = vpop.f32.mrb[0].mxu0
      %v815 = vadd.f32 0.0, %v814
      %v816 = vpop.f32.mrb[0].mxu0
      %v817 = vpop.f32.mrb[0].mxu0
      %v818 = vpop.f32.mrb[0].mxu0
      %819 = vdwg.mxu0
      %v820 = vpack.i.b16 %v677, %v677
      %v821 = vlaneseq
      %v822 = vshrl.u32 %v821, 7
      %v823 = vsub.s32 0, %v822
      %v824 = vrot.slane %v820, %v823
      %826 = vmatprep.subr.bf16.mxu0 0
      %827 = vmatpush1.bf16.xpose.msra.mxu0 %v643
      %828 = vmatprep.subr.bf16.mxu0 0
      %829 = vmatpush1.bf16.xpose.msra.mxu0 0
      %830 = vmatprep.subr.bf16.mxu0 0
      %831 = vmatpush1.bf16.xpose.msra.mxu0 0
      %832 = vmatprep.subr.bf16.mxu0 0
      %833 = vmatpush1.bf16.xpose.msra.mxu0 0
      %834 = vmatprep.subr.bf16.mxu0 0
      %835 = vmatpush1.bf16.xpose.msra.mxu0 0
      %836 = vmatprep.subr.bf16.mxu0 0
      %837 = vmatpush1.bf16.xpose.msra.mxu0 0
      %838 = vmatprep.subr.bf16.mxu0 0
      %839 = vmatpush1.bf16.xpose.msra.mxu0 0
      %840 = vmatprep.subr.bf16.mxu0 0
      %841 = vmatpush1.bf16.xpose.msra.mxu0 0
      %842 = vmatprep.subr.bf16.mxu0 0
      %843 = vmatpush1.bf16.xpose.msra.mxu0 0
      %844 = vmatprep.subr.bf16.mxu0 0
      %845 = vmatpush1.bf16.xpose.msra.mxu0 0
      %846 = vmatprep.subr.bf16.mxu0 0
      %847 = vmatpush1.bf16.xpose.msra.mxu0 0
      %848 = vmatprep.subr.bf16.mxu0 0
      %849 = vmatpush1.bf16.xpose.msra.mxu0 0
      %850 = vmatprep.subr.bf16.mxu0 0
      %851 = vmatpush1.bf16.xpose.msra.mxu0 0
      %852 = vmatprep.subr.bf16.mxu0 0
      %853 = vmatpush1.bf16.xpose.msra.mxu0 0
      %854 = vmatprep.subr.bf16.mxu0 0
      %855 = vmatpush1.bf16.xpose.msra.mxu0 0
      %856 = vmatprep.subr.bf16.mxu0 0
      %857 = vmatpush1.bf16.xpose.msra.mxu0 0
      %858 = vmatprep.mubr.bf16.mxu0 0
      %859 = vmatmul.mubr.bf16.gmra.mrb[0].mxu0 %v824
      %v860 = vpop.f32.mrb[0].mxu0
      %v861 = vadd.f32 0.0, %v860
      %v862 = vpop.f32.mrb[0].mxu0
      %v863 = vpop.f32.mrb[0].mxu0
      %v864 = vpop.f32.mrb[0].mxu0
      %865 = vdwg.mxu0
      %v866 = vpack.i.b16 %v678, %v678
      %v867 = vlaneseq
      %v868 = vshrl.u32 %v867, 7
      %v869 = vsub.s32 0, %v868
      %v870 = vrot.slane %v866, %v869
      %872 = vmatprep.subr.bf16.mxu0 0
      %873 = vmatpush1.bf16.xpose.msra.mxu0 %v644
      %874 = vmatprep.subr.bf16.mxu0 0
      %875 = vmatpush1.bf16.xpose.msra.mxu0 0
      %876 = vmatprep.subr.bf16.mxu0 0
      %877 = vmatpush1.bf16.xpose.msra.mxu0 0
      %878 = vmatprep.subr.bf16.mxu0 0
      %879 = vmatpush1.bf16.xpose.msra.mxu0 0
      %880 = vmatprep.subr.bf16.mxu0 0
      %881 = vmatpush1.bf16.xpose.msra.mxu0 0
      %882 = vmatprep.subr.bf16.mxu0 0
      %883 = vmatpush1.bf16.xpose.msra.mxu0 0
      %884 = vmatprep.subr.bf16.mxu0 0
      %885 = vmatpush1.bf16.xpose.msra.mxu0 0
      %886 = vmatprep.subr.bf16.mxu0 0
      %887 = vmatpush1.bf16.xpose.msra.mxu0 0
      %888 = vmatprep.subr.bf16.mxu0 0
      %889 = vmatpush1.bf16.xpose.msra.mxu0 0
      %890 = vmatprep.subr.bf16.mxu0 0
      %891 = vmatpush1.bf16.xpose.msra.mxu0 0
      %892 = vmatprep.subr.bf16.mxu0 0
      %893 = vmatpush1.bf16.xpose.msra.mxu0 0
      %894 = vmatprep.subr.bf16.mxu0 0
      %895 = vmatpush1.bf16.xpose.msra.mxu0 0
      %896 = vmatprep.subr.bf16.mxu0 0
      %897 = vmatpush1.bf16.xpose.msra.mxu0 0
      %898 = vmatprep.subr.bf16.mxu0 0
      %899 = vmatpush1.bf16.xpose.msra.mxu0 0
      %900 = vmatprep.subr.bf16.mxu0 0
      %901 = vmatpush1.bf16.xpose.msra.mxu0 0
      %902 = vmatprep.subr.bf16.mxu0 0
      %903 = vmatpush1.bf16.xpose.msra.mxu0 0
      %904 = vmatprep.mubr.bf16.mxu0 0
      %905 = vmatmul.mubr.bf16.gmra.mrb[0].mxu0 %v870
      %v906 = vpop.f32.mrb[0].mxu0
      %v907 = vadd.f32 0.0, %v906
      %v908 = vpop.f32.mrb[0].mxu0
      %v909 = vpop.f32.mrb[0].mxu0
      %v910 = vpop.f32.mrb[0].mxu0
      %911 = vdwg.mxu0
      %v912 = vpack.i.b16 %v679, %v679
      %v913 = vlaneseq
      %v914 = vshrl.u32 %v913, 7
      %v915 = vsub.s32 0, %v914
      %v916 = vrot.slane %v912, %v915
      %918 = vmatprep.subr.bf16.mxu0 0
      %919 = vmatpush1.bf16.xpose.msra.mxu0 %v645
      %920 = vmatprep.subr.bf16.mxu0 0
      %921 = vmatpush1.bf16.xpose.msra.mxu0 0
      %922 = vmatprep.subr.bf16.mxu0 0
      %923 = vmatpush1.bf16.xpose.msra.mxu0 0
      %924 = vmatprep.subr.bf16.mxu0 0
      %925 = vmatpush1.bf16.xpose.msra.mxu0 0
      %926 = vmatprep.subr.bf16.mxu0 0
      %927 = vmatpush1.bf16.xpose.msra.mxu0 0
      %928 = vmatprep.subr.bf16.mxu0 0
      %929 = vmatpush1.bf16.xpose.msra.mxu0 0
      %930 = vmatprep.subr.bf16.mxu0 0
      %931 = vmatpush1.bf16.xpose.msra.mxu0 0
      %932 = vmatprep.subr.bf16.mxu0 0
      %933 = vmatpush1.bf16.xpose.msra.mxu0 0
      %934 = vmatprep.subr.bf16.mxu0 0
      %935 = vmatpush1.bf16.xpose.msra.mxu0 0
      %936 = vmatprep.subr.bf16.mxu0 0
      %937 = vmatpush1.bf16.xpose.msra.mxu0 0
      %938 = vmatprep.subr.bf16.mxu0 0
      %939 = vmatpush1.bf16.xpose.msra.mxu0 0
      %940 = vmatprep.subr.bf16.mxu0 0
      %941 = vmatpush1.bf16.xpose.msra.mxu0 0
      %942 = vmatprep.subr.bf16.mxu0 0
      %943 = vmatpush1.bf16.xpose.msra.mxu0 0
      %944 = vmatprep.subr.bf16.mxu0 0
      %945 = vmatpush1.bf16.xpose.msra.mxu0 0
      %946 = vmatprep.subr.bf16.mxu0 0
      %947 = vmatpush1.bf16.xpose.msra.mxu0 0
      %948 = vmatprep.subr.bf16.mxu0 0
      %949 = vmatpush1.bf16.xpose.msra.mxu0 0
      %950 = vmatprep.mubr.bf16.mxu0 0
      %951 = vmatmul.mubr.bf16.gmra.mrb[0].mxu0 %v916
      %v952 = vpop.f32.mrb[0].mxu0
      %v953 = vadd.f32 0.0, %v952
      %v954 = vpop.f32.mrb[0].mxu0
      %v955 = vpop.f32.mrb[0].mxu0
      %v956 = vpop.f32.mrb[0].mxu0
      %957 = vdwg.mxu0
      %v958 = vpack.i.b16 %v680, %v680
      %v959 = vlaneseq
      %v960 = vshrl.u32 %v959, 7
      %v961 = vsub.s32 0, %v960
      %v962 = vrot.slane %v958, %v961
      %964 = vmatprep.subr.bf16.mxu0 0
      %965 = vmatpush1.bf16.xpose.msra.mxu0 %v646
      %966 = vmatprep.subr.bf16.mxu0 0
      %967 = vmatpush1.bf16.xpose.msra.mxu0 0
      %968 = vmatprep.subr.bf16.mxu0 0
      %969 = vmatpush1.bf16.xpose.msra.mxu0 0
      %970 = vmatprep.subr.bf16.mxu0 0
      %971 = vmatpush1.bf16.xpose.msra.mxu0 0
      %972 = vmatprep.subr.bf16.mxu0 0
      %973 = vmatpush1.bf16.xpose.msra.mxu0 0
      %974 = vmatprep.subr.bf16.mxu0 0
      %975 = vmatpush1.bf16.xpose.msra.mxu0 0
      %976 = vmatprep.subr.bf16.mxu0 0
      %977 = vmatpush1.bf16.xpose.msra.mxu0 0
      %978 = vmatprep.subr.bf16.mxu0 0
      %979 = vmatpush1.bf16.xpose.msra.mxu0 0
      %980 = vmatprep.subr.bf16.mxu0 0
      %981 = vmatpush1.bf16.xpose.msra.mxu0 0
      %982 = vmatprep.subr.bf16.mxu0 0
      %983 = vmatpush1.bf16.xpose.msra.mxu0 0
      %984 = vmatprep.subr.bf16.mxu0 0
      %985 = vmatpush1.bf16.xpose.msra.mxu0 0
      %986 = vmatprep.subr.bf16.mxu0 0
      %987 = vmatpush1.bf16.xpose.msra.mxu0 0
      %988 = vmatprep.subr.bf16.mxu0 0
      %989 = vmatpush1.bf16.xpose.msra.mxu0 0
      %990 = vmatprep.subr.bf16.mxu0 0
      %991 = vmatpush1.bf16.xpose.msra.mxu0 0
      %992 = vmatprep.subr.bf16.mxu0 0
      %993 = vmatpush1.bf16.xpose.msra.mxu0 0
      %994 = vmatprep.subr.bf16.mxu0 0
      %995 = vmatpush1.bf16.xpose.msra.mxu0 0
      %996 = vmatprep.mubr.bf16.mxu0 0
      %997 = vmatmul.mubr.bf16.gmra.mrb[0].mxu0 %v962
      %v998 = vpop.f32.mrb[0].mxu0
      %v999 = vadd.f32 0.0, %v998
      %v1000 = vpop.f32.mrb[0].mxu0
      %v1001 = vpop.f32.mrb[0].mxu0
      %v1002 = vpop.f32.mrb[0].mxu0
      %1003 = vdwg.mxu0
      %v1004 = vpack.i.b16 %v681, %v681
      %v1005 = vlaneseq
      %v1006 = vshrl.u32 %v1005, 7
      %v1007 = vsub.s32 0, %v1006
      %v1008 = vrot.slane %v1004, %v1007
      %1010 = vmatprep.subr.bf16.mxu0 0
      %1011 = vmatpush1.bf16.xpose.msra.mxu0 %v647
      %1012 = vmatprep.subr.bf16.mxu0 0
      %1013 = vmatpush1.bf16.xpose.msra.mxu0 0
      %1014 = vmatprep.subr.bf16.mxu0 0
      %1015 = vmatpush1.bf16.xpose.msra.mxu0 0
      %1016 = vmatprep.subr.bf16.mxu0 0
      %1017 = vmatpush1.bf16.xpose.msra.mxu0 0
      %1018 = vmatprep.subr.bf16.mxu0 0
      %1019 = vmatpush1.bf16.xpose.msra.mxu0 0
      %1020 = vmatprep.subr.bf16.mxu0 0
      %1021 = vmatpush1.bf16.xpose.msra.mxu0 0
      %1022 = vmatprep.subr.bf16.mxu0 0
      %1023 = vmatpush1.bf16.xpose.msra.mxu0 0
      %1024 = vmatprep.subr.bf16.mxu0 0
      %1025 = vmatpush1.bf16.xpose.msra.mxu0 0
      %1026 = vmatprep.subr.bf16.mxu0 0
      %1027 = vmatpush1.bf16.xpose.msra.mxu0 0
      %1028 = vmatprep.subr.bf16.mxu0 0
      %1029 = vmatpush1.bf16.xpose.msra.mxu0 0
      %1030 = vmatprep.subr.bf16.mxu0 0
      %1031 = vmatpush1.bf16.xpose.msra.mxu0 0
      %1032 = vmatprep.subr.bf16.mxu0 0
      %1033 = vmatpush1.bf16.xpose.msra.mxu0 0
      %1034 = vmatprep.subr.bf16.mxu0 0
      %1035 = vmatpush1.bf16.xpose.msra.mxu0 0
      %1036 = vmatprep.subr.bf16.mxu0 0
      %1037 = vmatpush1.bf16.xpose.msra.mxu0 0
      %1038 = vmatprep.subr.bf16.mxu0 0
      %1039 = vmatpush1.bf16.xpose.msra.mxu0 0
      %1040 = vmatprep.subr.bf16.mxu0 0
      %1041 = vmatpush1.bf16.xpose.msra.mxu0 0
      %1042 = vmatprep.mubr.bf16.mxu0 0
      %1043 = vmatmul.mubr.bf16.gmra.mrb[0].mxu0 %v1008
      %v1044 = vpop.f32.mrb[0].mxu0
      %v1045 = vadd.f32 0.0, %v1044
      %v1046 = vpop.f32.mrb[0].mxu0
      %v1047 = vpop.f32.mrb[0].mxu0
      %v1048 = vpop.f32.mrb[0].mxu0
      %1049 = vdwg.mxu0
      %vm1050 = vcmask 57344
      %v1051 = vsel %vm1050, %v723, -inf
      %1052 = vmax.xlane.f32.xlu0 %v1051
      %v1053 = vpop.xlane.xlu0 %1052
      %v1054 = vsel %vm1050, %v769, -inf
      %1055 = vmax.xlane.f32.xlu0 %v1054
      %v1056 = vpop.xlane.xlu0 %1055
      %v1057 = vsel %vm1050, %v815, -inf
      %1058 = vmax.xlane.f32.xlu0 %v1057
      %v1059 = vpop.xlane.xlu0 %1058
      %v1060 = vsel %vm1050, %v861, -inf
      %1061 = vmax.xlane.f32.xlu0 %v1060
      %v1062 = vpop.xlane.xlu0 %1061
      %v1063 = vsel %vm1050, %v907, -inf
      %1064 = vmax.xlane.f32.xlu0 %v1063
      %v1065 = vpop.xlane.xlu0 %1064
      %v1066 = vsel %vm1050, %v953, -inf
      %1067 = vmax.xlane.f32.xlu0 %v1066
      %v1068 = vpop.xlane.xlu0 %1067
      %v1069 = vsel %vm1050, %v999, -inf
      %1070 = vmax.xlane.f32.xlu0 %v1069
      %v1071 = vpop.xlane.xlu0 %1070
      %v1072 = vsel %vm1050, %v1045, -inf
      %1073 = vmax.xlane.f32.xlu0 %v1072
      %v1074 = vpop.xlane.xlu0 %1073
      %v1075 = vsub.f32 %v723, %v1053
      %v1076 = vsub.f32 %v769, %v1056
      %v1077 = vsub.f32 %v815, %v1059
      %v1078 = vsub.f32 %v861, %v1062
      %v1079 = vsub.f32 %v907, %v1065
      %v1080 = vsub.f32 %v953, %v1068
      %v1081 = vsub.f32 %v999, %v1071
      %v1082 = vsub.f32 %v1045, %v1074
      %v1083 = vmul.f32 %v1075, 1.442695
      %v1084 = vpow.pop %v1083
      %v1085 = vmul.f32 %v1076, 1.442695
      %v1086 = vpow.pop %v1085
      %v1087 = vmul.f32 %v1077, 1.442695
      %v1088 = vpow.pop %v1087
      %v1089 = vmul.f32 %v1078, 1.442695
      %v1090 = vpow.pop %v1089
      %v1091 = vmul.f32 %v1079, 1.442695
      %v1092 = vpow.pop %v1091
      %v1093 = vmul.f32 %v1080, 1.442695
      %v1094 = vpow.pop %v1093
      %v1095 = vmul.f32 %v1081, 1.442695
      %v1096 = vpow.pop %v1095
      %v1097 = vmul.f32 %v1082, 1.442695
      %v1098 = vpow.pop %v1097
      %v1099 = vsel %vm1050, %v1084, 0.0
      %1100 = vadd.xlane.f32.xlu0 %v1099
      %v1101 = vpop.xlane.xlu0 %1100
      %v1102 = vsel %vm1050, %v1086, 0.0
      %1103 = vadd.xlane.f32.xlu0 %v1102
      %v1104 = vpop.xlane.xlu0 %1103
      %v1105 = vsel %vm1050, %v1088, 0.0
      %1106 = vadd.xlane.f32.xlu0 %v1105
      %v1107 = vpop.xlane.xlu0 %1106
      %v1108 = vsel %vm1050, %v1090, 0.0
      %1109 = vadd.xlane.f32.xlu0 %v1108
      %v1110 = vpop.xlane.xlu0 %1109
      %v1111 = vsel %vm1050, %v1092, 0.0
      %1112 = vadd.xlane.f32.xlu0 %v1111
      %v1113 = vpop.xlane.xlu0 %1112
      %v1114 = vsel %vm1050, %v1094, 0.0
      %1115 = vadd.xlane.f32.xlu0 %v1114
      %v1116 = vpop.xlane.xlu0 %1115
      %v1117 = vsel %vm1050, %v1096, 0.0
      %1118 = vadd.xlane.f32.xlu0 %v1117
      %v1119 = vpop.xlane.xlu0 %1118
      %v1120 = vsel %vm1050, %v1098, 0.0
      %1121 = vadd.xlane.f32.xlu0 %v1120
      %v1122 = vpop.xlane.xlu0 %1121
      %v1123 = vrcp.pop %v1101
      %v1124 = vrcp.pop %v1104
      %v1125 = vrcp.pop %v1107
      %v1126 = vrcp.pop %v1110
      %v1127 = vrcp.pop %v1113
      %v1128 = vrcp.pop %v1116
      %v1129 = vrcp.pop %v1119
      %v1130 = vrcp.pop %v1122
      %v1131 = vmul.f32 %v1084, %v1123
      %v1132 = vmul.f32 %v1086, %v1124
      %v1133 = vmul.f32 %v1088, %v1125
      %v1134 = vmul.f32 %v1090, %v1126
      %v1135 = vmul.f32 %v1092, %v1127
      %v1136 = vmul.f32 %v1094, %v1128
      %v1137 = vmul.f32 %v1096, %v1129
      %v1138 = vmul.f32 %v1098, %v1130
      %v1139 = vpack.c.bf16 %v1131, %v1131
      %v1140 = vpack.c.bf16 %v1132, %v1132
      %v1141 = vpack.c.bf16 %v1133, %v1133
      %v1142 = vpack.c.bf16 %v1134, %v1134
      %v1143 = vpack.c.bf16 %v1135, %v1135
      %v1144 = vpack.c.bf16 %v1136, %v1136
      %v1145 = vpack.c.bf16 %v1137, %v1137
      %v1146 = vpack.c.bf16 %v1138, %v1138
      %vm1147 = vcmask 64512
      %v1149 = vsel %vm1147, %v1139, 0
      %vm1151 = vcmask 1043456
      %v1153 = vsel %vm1151, %v640, 0
      %1155 = vmatprep.subr.bf16.mxu0 0
      %1156 = vmatpush1.bf16.msra.mxu0 %v1153
      %1157 = vmatprep.subr.bf16.mxu0 0
      %1158 = vmatpush1.bf16.msra.mxu0 0
      %1159 = vmatprep.subr.bf16.mxu0 0
      %1160 = vmatpush1.bf16.msra.mxu0 0
      %1161 = vmatprep.subr.bf16.mxu0 0
      %1162 = vmatpush1.bf16.msra.mxu0 0
      %1163 = vmatprep.subr.bf16.mxu0 0
      %1164 = vmatpush1.bf16.msra.mxu0 0
      %1165 = vmatprep.subr.bf16.mxu0 0
      %1166 = vmatpush1.bf16.msra.mxu0 0
      %1167 = vmatprep.subr.bf16.mxu0 0
      %1168 = vmatpush1.bf16.msra.mxu0 0
      %1169 = vmatprep.subr.bf16.mxu0 0
      %1170 = vmatpush1.bf16.msra.mxu0 0
      %1171 = vmatprep.subr.bf16.mxu0 0
      %1172 = vmatpush1.bf16.msra.mxu0 0
      %1173 = vmatprep.subr.bf16.mxu0 0
      %1174 = vmatpush1.bf16.msra.mxu0 0
      %1175 = vmatprep.subr.bf16.mxu0 0
      %1176 = vmatpush1.bf16.msra.mxu0 0
      %1177 = vmatprep.subr.bf16.mxu0 0
      %1178 = vmatpush1.bf16.msra.mxu0 0
      %1179 = vmatprep.subr.bf16.mxu0 0
      %1180 = vmatpush1.bf16.msra.mxu0 0
      %1181 = vmatprep.subr.bf16.mxu0 0
      %1182 = vmatpush1.bf16.msra.mxu0 0
      %1183 = vmatprep.subr.bf16.mxu0 0
      %1184 = vmatpush1.bf16.msra.mxu0 0
      %1185 = vmatprep.subr.bf16.mxu0 0
      %1186 = vmatpush1.bf16.msra.mxu0 0
      %1187 = vmatprep.mubr.bf16.mxu0 0
      %1188 = vmatmul.mubr.bf16.gmra.mrb[0].mxu0 %v1149
      %v1189 = vpop.f32.mrb[0].mxu0
      %v1190 = vadd.f32 0.0, %v1189
      %v1191 = vpop.f32.mrb[0].mxu0
      %v1192 = vpop.f32.mrb[0].mxu0
      %v1193 = vpop.f32.mrb[0].mxu0
      %1194 = vdwg.mxu0
      %v1196 = vsel %vm1147, %v1140, 0
      %v1199 = vsel %vm1151, %v641, 0
      %1201 = vmatprep.subr.bf16.mxu0 0
      %1202 = vmatpush1.bf16.msra.mxu0 %v1199
      %1203 = vmatprep.subr.bf16.mxu0 0
      %1204 = vmatpush1.bf16.msra.mxu0 0
      %1205 = vmatprep.subr.bf16.mxu0 0
      %1206 = vmatpush1.bf16.msra.mxu0 0
      %1207 = vmatprep.subr.bf16.mxu0 0
      %1208 = vmatpush1.bf16.msra.mxu0 0
      %1209 = vmatprep.subr.bf16.mxu0 0
      %1210 = vmatpush1.bf16.msra.mxu0 0
      %1211 = vmatprep.subr.bf16.mxu0 0
      %1212 = vmatpush1.bf16.msra.mxu0 0
      %1213 = vmatprep.subr.bf16.mxu0 0
      %1214 = vmatpush1.bf16.msra.mxu0 0
      %1215 = vmatprep.subr.bf16.mxu0 0
      %1216 = vmatpush1.bf16.msra.mxu0 0
      %1217 = vmatprep.subr.bf16.mxu0 0
      %1218 = vmatpush1.bf16.msra.mxu0 0
      %1219 = vmatprep.subr.bf16.mxu0 0
      %1220 = vmatpush1.bf16.msra.mxu0 0
      %1221 = vmatprep.subr.bf16.mxu0 0
      %1222 = vmatpush1.bf16.msra.mxu0 0
      %1223 = vmatprep.subr.bf16.mxu0 0
      %1224 = vmatpush1.bf16.msra.mxu0 0
      %1225 = vmatprep.subr.bf16.mxu0 0
      %1226 = vmatpush1.bf16.msra.mxu0 0
      %1227 = vmatprep.subr.bf16.mxu0 0
      %1228 = vmatpush1.bf16.msra.mxu0 0
      %1229 = vmatprep.subr.bf16.mxu0 0
      %1230 = vmatpush1.bf16.msra.mxu0 0
      %1231 = vmatprep.subr.bf16.mxu0 0
      %1232 = vmatpush1.bf16.msra.mxu0 0
      %1233 = vmatprep.mubr.bf16.mxu0 0
      %1234 = vmatmul.mubr.bf16.gmra.mrb[0].mxu0 %v1196
      %v1235 = vpop.f32.mrb[0].mxu0
      %v1236 = vadd.f32 0.0, %v1235
      %v1237 = vpop.f32.mrb[0].mxu0
      %v1238 = vpop.f32.mrb[0].mxu0
      %v1239 = vpop.f32.mrb[0].mxu0
      %1240 = vdwg.mxu0
      %v1242 = vsel %vm1147, %v1141, 0
      %v1245 = vsel %vm1151, %v642, 0
      %1247 = vmatprep.subr.bf16.mxu0 0
      %1248 = vmatpush1.bf16.msra.mxu0 %v1245
      %1249 = vmatprep.subr.bf16.mxu0 0
      %1250 = vmatpush1.bf16.msra.mxu0 0
      %1251 = vmatprep.subr.bf16.mxu0 0
      %1252 = vmatpush1.bf16.msra.mxu0 0
      %1253 = vmatprep.subr.bf16.mxu0 0
      %1254 = vmatpush1.bf16.msra.mxu0 0
      %1255 = vmatprep.subr.bf16.mxu0 0
      %1256 = vmatpush1.bf16.msra.mxu0 0
      %1257 = vmatprep.subr.bf16.mxu0 0
      %1258 = vmatpush1.bf16.msra.mxu0 0
      %1259 = vmatprep.subr.bf16.mxu0 0
      %1260 = vmatpush1.bf16.msra.mxu0 0
      %1261 = vmatprep.subr.bf16.mxu0 0
      %1262 = vmatpush1.bf16.msra.mxu0 0
      %1263 = vmatprep.subr.bf16.mxu0 0
      %1264 = vmatpush1.bf16.msra.mxu0 0
      %1265 = vmatprep.subr.bf16.mxu0 0
      %1266 = vmatpush1.bf16.msra.mxu0 0
      %1267 = vmatprep.subr.bf16.mxu0 0
      %1268 = vmatpush1.bf16.msra.mxu0 0
      %1269 = vmatprep.subr.bf16.mxu0 0
      %1270 = vmatpush1.bf16.msra.mxu0 0
      %1271 = vmatprep.subr.bf16.mxu0 0
      %1272 = vmatpush1.bf16.msra.mxu0 0
      %1273 = vmatprep.subr.bf16.mxu0 0
      %1274 = vmatpush1.bf16.msra.mxu0 0
      %1275 = vmatprep.subr.bf16.mxu0 0
      %1276 = vmatpush1.bf16.msra.mxu0 0
      %1277 = vmatprep.subr.bf16.mxu0 0
      %1278 = vmatpush1.bf16.msra.mxu0 0
      %1279 = vmatprep.mubr.bf16.mxu0 0
      %1280 = vmatmul.mubr.bf16.gmra.mrb[0].mxu0 %v1242
      %v1281 = vpop.f32.mrb[0].mxu0
      %v1282 = vadd.f32 0.0, %v1281
      %v1283 = vpop.f32.mrb[0].mxu0
      %v1284 = vpop.f32.mrb[0].mxu0
      %v1285 = vpop.f32.mrb[0].mxu0
      %1286 = vdwg.mxu0
      %v1288 = vsel %vm1147, %v1142, 0
      %v1291 = vsel %vm1151, %v643, 0
      %1293 = vmatprep.subr.bf16.mxu0 0
      %1294 = vmatpush1.bf16.msra.mxu0 %v1291
      %1295 = vmatprep.subr.bf16.mxu0 0
      %1296 = vmatpush1.bf16.msra.mxu0 0
      %1297 = vmatprep.subr.bf16.mxu0 0
      %1298 = vmatpush1.bf16.msra.mxu0 0
      %1299 = vmatprep.subr.bf16.mxu0 0
      %1300 = vmatpush1.bf16.msra.mxu0 0
      %1301 = vmatprep.subr.bf16.mxu0 0
      %1302 = vmatpush1.bf16.msra.mxu0 0
      %1303 = vmatprep.subr.bf16.mxu0 0
      %1304 = vmatpush1.bf16.msra.mxu0 0
      %1305 = vmatprep.subr.bf16.mxu0 0
      %1306 = vmatpush1.bf16.msra.mxu0 0
      %1307 = vmatprep.subr.bf16.mxu0 0
      %1308 = vmatpush1.bf16.msra.mxu0 0
      %1309 = vmatprep.subr.bf16.mxu0 0
      %1310 = vmatpush1.bf16.msra.mxu0 0
      %1311 = vmatprep.subr.bf16.mxu0 0
      %1312 = vmatpush1.bf16.msra.mxu0 0
      %1313 = vmatprep.subr.bf16.mxu0 0
      %1314 = vmatpush1.bf16.msra.mxu0 0
      %1315 = vmatprep.subr.bf16.mxu0 0
      %1316 = vmatpush1.bf16.msra.mxu0 0
      %1317 = vmatprep.subr.bf16.mxu0 0
      %1318 = vmatpush1.bf16.msra.mxu0 0
      %1319 = vmatprep.subr.bf16.mxu0 0
      %1320 = vmatpush1.bf16.msra.mxu0 0
      %1321 = vmatprep.subr.bf16.mxu0 0
      %1322 = vmatpush1.bf16.msra.mxu0 0
      %1323 = vmatprep.subr.bf16.mxu0 0
      %1324 = vmatpush1.bf16.msra.mxu0 0
      %1325 = vmatprep.mubr.bf16.mxu0 0
      %1326 = vmatmul.mubr.bf16.gmra.mrb[0].mxu0 %v1288
      %v1327 = vpop.f32.mrb[0].mxu0
      %v1328 = vadd.f32 0.0, %v1327
      %v1329 = vpop.f32.mrb[0].mxu0
      %v1330 = vpop.f32.mrb[0].mxu0
      %v1331 = vpop.f32.mrb[0].mxu0
      %1332 = vdwg.mxu0
      %v1334 = vsel %vm1147, %v1143, 0
      %v1337 = vsel %vm1151, %v644, 0
      %1339 = vmatprep.subr.bf16.mxu0 0
      %1340 = vmatpush1.bf16.msra.mxu0 %v1337
      %1341 = vmatprep.subr.bf16.mxu0 0
      %1342 = vmatpush1.bf16.msra.mxu0 0
      %1343 = vmatprep.subr.bf16.mxu0 0
      %1344 = vmatpush1.bf16.msra.mxu0 0
      %1345 = vmatprep.subr.bf16.mxu0 0
      %1346 = vmatpush1.bf16.msra.mxu0 0
      %1347 = vmatprep.subr.bf16.mxu0 0
      %1348 = vmatpush1.bf16.msra.mxu0 0
      %1349 = vmatprep.subr.bf16.mxu0 0
      %1350 = vmatpush1.bf16.msra.mxu0 0
      %1351 = vmatprep.subr.bf16.mxu0 0
      %1352 = vmatpush1.bf16.msra.mxu0 0
      %1353 = vmatprep.subr.bf16.mxu0 0
      %1354 = vmatpush1.bf16.msra.mxu0 0
      %1355 = vmatprep.subr.bf16.mxu0 0
      %1356 = vmatpush1.bf16.msra.mxu0 0
      %1357 = vmatprep.subr.bf16.mxu0 0
      %1358 = vmatpush1.bf16.msra.mxu0 0
      %1359 = vmatprep.subr.bf16.mxu0 0
      %1360 = vmatpush1.bf16.msra.mxu0 0
      %1361 = vmatprep.subr.bf16.mxu0 0
      %1362 = vmatpush1.bf16.msra.mxu0 0
      %1363 = vmatprep.subr.bf16.mxu0 0
      %1364 = vmatpush1.bf16.msra.mxu0 0
      %1365 = vmatprep.subr.bf16.mxu0 0
      %1366 = vmatpush1.bf16.msra.mxu0 0
      %1367 = vmatprep.subr.bf16.mxu0 0
      %1368 = vmatpush1.bf16.msra.mxu0 0
      %1369 = vmatprep.subr.bf16.mxu0 0
      %1370 = vmatpush1.bf16.msra.mxu0 0
      %1371 = vmatprep.mubr.bf16.mxu0 0
      %1372 = vmatmul.mubr.bf16.gmra.mrb[0].mxu0 %v1334
      %v1373 = vpop.f32.mrb[0].mxu0
      %v1374 = vadd.f32 0.0, %v1373
      %v1375 = vpop.f32.mrb[0].mxu0
      %v1376 = vpop.f32.mrb[0].mxu0
      %v1377 = vpop.f32.mrb[0].mxu0
      %1378 = vdwg.mxu0
      %v1380 = vsel %vm1147, %v1144, 0
      %v1383 = vsel %vm1151, %v645, 0
      %1385 = vmatprep.subr.bf16.mxu0 0
      %1386 = vmatpush1.bf16.msra.mxu0 %v1383
      %1387 = vmatprep.subr.bf16.mxu0 0
      %1388 = vmatpush1.bf16.msra.mxu0 0
      %1389 = vmatprep.subr.bf16.mxu0 0
      %1390 = vmatpush1.bf16.msra.mxu0 0
      %1391 = vmatprep.subr.bf16.mxu0 0
      %1392 = vmatpush1.bf16.msra.mxu0 0
      %1393 = vmatprep.subr.bf16.mxu0 0
      %1394 = vmatpush1.bf16.msra.mxu0 0
      %1395 = vmatprep.subr.bf16.mxu0 0
      %1396 = vmatpush1.bf16.msra.mxu0 0
      %1397 = vmatprep.subr.bf16.mxu0 0
      %1398 = vmatpush1.bf16.msra.mxu0 0
      %1399 = vmatprep.subr.bf16.mxu0 0
      %1400 = vmatpush1.bf16.msra.mxu0 0
      %1401 = vmatprep.subr.bf16.mxu0 0
      %1402 = vmatpush1.bf16.msra.mxu0 0
      %1403 = vmatprep.subr.bf16.mxu0 0
      %1404 = vmatpush1.bf16.msra.mxu0 0
      %1405 = vmatprep.subr.bf16.mxu0 0
      %1406 = vmatpush1.bf16.msra.mxu0 0
      %1407 = vmatprep.subr.bf16.mxu0 0
      %1408 = vmatpush1.bf16.msra.mxu0 0
      %1409 = vmatprep.subr.bf16.mxu0 0
      %1410 = vmatpush1.bf16.msra.mxu0 0
      %1411 = vmatprep.subr.bf16.mxu0 0
      %1412 = vmatpush1.bf16.msra.mxu0 0
      %1413 = vmatprep.subr.bf16.mxu0 0
      %1414 = vmatpush1.bf16.msra.mxu0 0
      %1415 = vmatprep.subr.bf16.mxu0 0
      %1416 = vmatpush1.bf16.msra.mxu0 0
      %1417 = vmatprep.mubr.bf16.mxu0 0
      %1418 = vmatmul.mubr.bf16.gmra.mrb[0].mxu0 %v1380
      %v1419 = vpop.f32.mrb[0].mxu0
      %v1420 = vadd.f32 0.0, %v1419
      %v1421 = vpop.f32.mrb[0].mxu0
      %v1422 = vpop.f32.mrb[0].mxu0
      %v1423 = vpop.f32.mrb[0].mxu0
      %1424 = vdwg.mxu0
      %v1426 = vsel %vm1147, %v1145, 0
      %v1429 = vsel %vm1151, %v646, 0
      %1431 = vmatprep.subr.bf16.mxu0 0
      %1432 = vmatpush1.bf16.msra.mxu0 %v1429
      %1433 = vmatprep.subr.bf16.mxu0 0
      %1434 = vmatpush1.bf16.msra.mxu0 0
      %1435 = vmatprep.subr.bf16.mxu0 0
      %1436 = vmatpush1.bf16.msra.mxu0 0
      %1437 = vmatprep.subr.bf16.mxu0 0
      %1438 = vmatpush1.bf16.msra.mxu0 0
      %1439 = vmatprep.subr.bf16.mxu0 0
      %1440 = vmatpush1.bf16.msra.mxu0 0
      %1441 = vmatprep.subr.bf16.mxu0 0
      %1442 = vmatpush1.bf16.msra.mxu0 0
      %1443 = vmatprep.subr.bf16.mxu0 0
      %1444 = vmatpush1.bf16.msra.mxu0 0
      %1445 = vmatprep.subr.bf16.mxu0 0
      %1446 = vmatpush1.bf16.msra.mxu0 0
      %1447 = vmatprep.subr.bf16.mxu0 0
      %1448 = vmatpush1.bf16.msra.mxu0 0
      %1449 = vmatprep.subr.bf16.mxu0 0
      %1450 = vmatpush1.bf16.msra.mxu0 0
      %1451 = vmatprep.subr.bf16.mxu0 0
      %1452 = vmatpush1.bf16.msra.mxu0 0
      %1453 = vmatprep.subr.bf16.mxu0 0
      %1454 = vmatpush1.bf16.msra.mxu0 0
      %1455 = vmatprep.subr.bf16.mxu0 0
      %1456 = vmatpush1.bf16.msra.mxu0 0
      %1457 = vmatprep.subr.bf16.mxu0 0
      %1458 = vmatpush1.bf16.msra.mxu0 0
      %1459 = vmatprep.subr.bf16.mxu0 0
      %1460 = vmatpush1.bf16.msra.mxu0 0
      %1461 = vmatprep.subr.bf16.mxu0 0
      %1462 = vmatpush1.bf16.msra.mxu0 0
      %1463 = vmatprep.mubr.bf16.mxu0 0
      %1464 = vmatmul.mubr.bf16.gmra.mrb[0].mxu0 %v1426
      %v1465 = vpop.f32.mrb[0].mxu0
      %v1466 = vadd.f32 0.0, %v1465
      %v1467 = vpop.f32.mrb[0].mxu0
      %v1468 = vpop.f32.mrb[0].mxu0
      %v1469 = vpop.f32.mrb[0].mxu0
      %1470 = vdwg.mxu0
      %v1472 = vsel %vm1147, %v1146, 0
      %v1475 = vsel %vm1151, %v647, 0
      %1477 = vmatprep.subr.bf16.mxu0 0
      %1478 = vmatpush1.bf16.msra.mxu0 %v1475
      %1479 = vmatprep.subr.bf16.mxu0 0
      %1480 = vmatpush1.bf16.msra.mxu0 0
      %1481 = vmatprep.subr.bf16.mxu0 0
      %1482 = vmatpush1.bf16.msra.mxu0 0
      %1483 = vmatprep.subr.bf16.mxu0 0
      %1484 = vmatpush1.bf16.msra.mxu0 0
      %1485 = vmatprep.subr.bf16.mxu0 0
      %1486 = vmatpush1.bf16.msra.mxu0 0
      %1487 = vmatprep.subr.bf16.mxu0 0
      %1488 = vmatpush1.bf16.msra.mxu0 0
      %1489 = vmatprep.subr.bf16.mxu0 0
      %1490 = vmatpush1.bf16.msra.mxu0 0
      %1491 = vmatprep.subr.bf16.mxu0 0
      %1492 = vmatpush1.bf16.msra.mxu0 0
      %1493 = vmatprep.subr.bf16.mxu0 0
      %1494 = vmatpush1.bf16.msra.mxu0 0
      %1495 = vmatprep.subr.bf16.mxu0 0
      %1496 = vmatpush1.bf16.msra.mxu0 0
      %1497 = vmatprep.subr.bf16.mxu0 0
      %1498 = vmatpush1.bf16.msra.mxu0 0
      %1499 = vmatprep.subr.bf16.mxu0 0
      %1500 = vmatpush1.bf16.msra.mxu0 0
      %1501 = vmatprep.subr.bf16.mxu0 0
      %1502 = vmatpush1.bf16.msra.mxu0 0
      %1503 = vmatprep.subr.bf16.mxu0 0
      %1504 = vmatpush1.bf16.msra.mxu0 0
      %1505 = vmatprep.subr.bf16.mxu0 0
      %1506 = vmatpush1.bf16.msra.mxu0 0
      %1507 = vmatprep.subr.bf16.mxu0 0
      %1508 = vmatpush1.bf16.msra.mxu0 0
      %1509 = vmatprep.mubr.bf16.mxu0 0
      %1510 = vmatmul.mubr.bf16.gmra.mrb[0].mxu0 %v1472
      %v1511 = vpop.f32.mrb[0].mxu0
      %v1512 = vadd.f32 0.0, %v1511
      %v1513 = vpop.f32.mrb[0].mxu0
      %v1514 = vpop.f32.mrb[0].mxu0
      %v1515 = vpop.f32.mrb[0].mxu0
      %1516 = vdwg.mxu0
      %v1517 = vpack.c.bf16 %v1190, %v1190
      %v1518 = vpack.c.bf16 %v1236, %v1236
      %v1519 = vpack.c.bf16 %v1282, %v1282
      %v1520 = vpack.c.bf16 %v1328, %v1328
      %v1521 = vpack.c.bf16 %v1374, %v1374
      %v1522 = vpack.c.bf16 %v1420, %v1420
      %v1523 = vpack.c.bf16 %v1466, %v1466
      %v1524 = vpack.c.bf16 %v1512, %v1512
      %v1525 = vld [vmem:[#allocation11] sm:$0xf]
      %v1526 = vld [vmem:[#allocation11 + $0x4] sm:$0xf]
      %v1527 = vld [vmem:[#allocation11 + $0x8] sm:$0xf]
      %v1528 = vld [vmem:[#allocation11 + $0xc] sm:$0xf]
      %v1529 = vld [vmem:[#allocation11 + $0x10] sm:$0xf]
      %v1530 = vld [vmem:[#allocation11 + $0x14] sm:$0xf]
      %v1531 = vld [vmem:[#allocation11 + $0x18] sm:$0xf]
      %v1532 = vld [vmem:[#allocation11 + $0x1c] sm:$0xf]
      %v1533 = vld [vmem:[#allocation11 + $0x20] sm:$0xf]
      %v1534 = vld [vmem:[#allocation11 + $0x24] sm:$0xf]
      %v1535 = vld [vmem:[#allocation11 + $0x28] sm:$0xf]
      %v1536 = vld [vmem:[#allocation11 + $0x2c] sm:$0xf]
      %v1537 = vld [vmem:[#allocation11 + $0x30] sm:$0xf]
      %v1538 = vld [vmem:[#allocation11 + $0x34] sm:$0xf]
      %v1539 = vld [vmem:[#allocation11 + $0x38] sm:$0xf]
      %v1540 = vld [vmem:[#allocation11 + $0x3c] sm:$0xf]
      %v1541 = vld [vmem:[#allocation13] sm:$0xf]
      %v1542 = vld [vmem:[#allocation13 + $0x4] sm:$0xf]
      %v1543 = vld [vmem:[#allocation13 + $0x8] sm:$0xf]
      %v1544 = vld [vmem:[#allocation13 + $0xc] sm:$0xf]
      %v1545 = vld [vmem:[#allocation13 + $0x10] sm:$0xf]
      %v1546 = vld [vmem:[#allocation13 + $0x14] sm:$0xf]
      %v1547 = vld [vmem:[#allocation13 + $0x18] sm:$0xf]
      %v1548 = vld [vmem:[#allocation13 + $0x1c] sm:$0xf]
      %v1549 = vld [vmem:[#allocation13 + $0x20] sm:$0xf]
      %v1550 = vld [vmem:[#allocation13 + $0x24] sm:$0xf]
      %v1551 = vld [vmem:[#allocation13 + $0x28] sm:$0xf]
      %v1552 = vld [vmem:[#allocation13 + $0x2c] sm:$0xf]
      %v1553 = vld [vmem:[#allocation13 + $0x30] sm:$0xf]
      %v1554 = vld [vmem:[#allocation13 + $0x34] sm:$0xf]
      %v1555 = vld [vmem:[#allocation13 + $0x38] sm:$0xf]
      %v1556 = vld [vmem:[#allocation13 + $0x3c] sm:$0xf]
      %v1573 = vunpack.c.l.b16 %v1541
      %v1574 = vunpack.c.l.b16 %v1542
      %v1575 = vunpack.c.l.b16 %v1543
      %v1576 = vunpack.c.l.b16 %v1544
      %v1577 = vunpack.c.l.b16 %v1545
      %v1578 = vunpack.c.l.b16 %v1546
      %v1579 = vunpack.c.l.b16 %v1547
      %v1580 = vunpack.c.l.b16 %v1548
      %v1581 = vunpack.c.l.b16 %v1549
      %v1582 = vunpack.c.l.b16 %v1550
      %v1583 = vunpack.c.l.b16 %v1551
      %v1584 = vunpack.c.l.b16 %v1552
      %v1585 = vunpack.c.l.b16 %v1553
      %v1586 = vunpack.c.l.b16 %v1554
      %v1587 = vunpack.c.l.b16 %v1555
      %v1588 = vunpack.c.l.b16 %v1556
      %v1589 = vpack.c.b16 %v1574, %v1573
      %v1590 = vpack.c.b16 %v1576, %v1575
      %v1591 = vpack.c.b16 %v1578, %v1577
      %v1592 = vpack.c.b16 %v1580, %v1579
      %v1593 = vpack.c.b16 %v1582, %v1581
      %v1594 = vpack.c.b16 %v1584, %v1583
      %v1595 = vpack.c.b16 %v1586, %v1585
      %v1596 = vpack.c.b16 %v1588, %v1587
      %1605 = vmatprep.subr.bf16.mxu0 0
      %1606 = vmatpush1.bf16.msra.mxu0 %v1589
      %1607 = vmatprep.subr.bf16.mxu0 0
      %1608 = vmatpush1.bf16.msra.mxu0 %v1590
      %1609 = vmatprep.subr.bf16.mxu0 0
      %1610 = vmatpush1.bf16.msra.mxu0 %v1591
      %1611 = vmatprep.subr.bf16.mxu0 0
      %1612 = vmatpush1.bf16.msra.mxu0 %v1592
      %1613 = vmatprep.subr.bf16.mxu0 0
      %1614 = vmatpush1.bf16.msra.mxu0 %v1593
      %1615 = vmatprep.subr.bf16.mxu0 0
      %1616 = vmatpush1.bf16.msra.mxu0 %v1594
      %1617 = vmatprep.subr.bf16.mxu0 0
      %1618 = vmatpush1.bf16.msra.mxu0 %v1595
      %1619 = vmatprep.subr.bf16.mxu0 0
      %1620 = vmatpush1.bf16.msra.mxu0 %v1596
      %1621 = vmatprep.subr.bf16.mxu0 0
      %1622 = vmatpush1.bf16.msra.mxu0 0
      %1623 = vmatprep.subr.bf16.mxu0 0
      %1624 = vmatpush1.bf16.msra.mxu0 0
      %1625 = vmatprep.subr.bf16.mxu0 0
      %1626 = vmatpush1.bf16.msra.mxu0 0
      %1627 = vmatprep.subr.bf16.mxu0 0
      %1628 = vmatpush1.bf16.msra.mxu0 0
      %1629 = vmatprep.subr.bf16.mxu0 0
      %1630 = vmatpush1.bf16.msra.mxu0 0
      %1631 = vmatprep.subr.bf16.mxu0 0
      %1632 = vmatpush1.bf16.msra.mxu0 0
      %1633 = vmatprep.subr.bf16.mxu0 0
      %1634 = vmatpush1.bf16.msra.mxu0 0
      %1635 = vmatprep.subr.bf16.mxu0 0
      %1636 = vmatpush1.bf16.msra.mxu0 0
      %1637 = vmatprep.mubr.bf16.mxu0 0
      %1638 = vmatmul.mubr.bf16.gmra.mrb[0].mxu0 %v648
      %v1639 = vpop.f32.mrb[0].mxu0
      %v1640 = vadd.f32 0.0, %v1639
      %v1641 = vpop.f32.mrb[0].mxu0
      %v1642 = vpop.f32.mrb[0].mxu0
      %v1643 = vpop.f32.mrb[0].mxu0
      %1644 = vdwg.mxu0
      %v1653 = vunpack.c.l.b16 %v1517
      %v1654 = vunpack.c.l.b16 %v1518
      %v1655 = vunpack.c.l.b16 %v1519
      %v1656 = vunpack.c.l.b16 %v1520
      %v1657 = vunpack.c.l.b16 %v1521
      %v1658 = vunpack.c.l.b16 %v1522
      %v1659 = vunpack.c.l.b16 %v1523
      %v1660 = vunpack.c.l.b16 %v1524
      %v1661 = vrot.slane %v1654, 7
      %vm1662 = vcmask 1041409
      %v1663 = vsel %vm1662, %v1661, %v1653
      %v1664 = vrot.slane %v1655, 6
      %vm1665 = vcmask 1042434
      %v1666 = vsel %vm1665, %v1664, %v1663
      %v1667 = vrot.slane %v1656, 5
      %vm1668 = vcmask 1043459
      %v1669 = vsel %vm1668, %v1667, %v1666
      %v1670 = vrot.slane %v1657, 4
      %vm1671 = vcmask 1044484
      %v1672 = vsel %vm1671, %v1670, %v1669
      %v1673 = vrot.slane %v1658, 3
      %vm1674 = vcmask 1045509
      %v1675 = vsel %vm1674, %v1673, %v1672
      %v1676 = vrot.slane %v1659, 2
      %vm1677 = vcmask 1046534
      %v1678 = vsel %vm1677, %v1676, %v1675
      %v1679 = vrot.slane %v1660, 1
      %vm1680 = vcmask 1047559
      %v1681 = vsel %vm1680, %v1679, %v1678
      %v1682 = vpack.c.b16 %v1681, %v1681
      %v1700 = vunpack.c.l.b16 %v1525
      %v1701 = vunpack.c.l.b16 %v1526
      %v1702 = vunpack.c.l.b16 %v1527
      %v1703 = vunpack.c.l.b16 %v1528
      %v1704 = vunpack.c.l.b16 %v1529
      %v1705 = vunpack.c.l.b16 %v1530
      %v1706 = vunpack.c.l.b16 %v1531
      %v1707 = vunpack.c.l.b16 %v1532
      %v1708 = vunpack.c.l.b16 %v1533
      %v1709 = vunpack.c.l.b16 %v1534
      %v1710 = vunpack.c.l.b16 %v1535
      %v1711 = vunpack.c.l.b16 %v1536
      %v1712 = vunpack.c.l.b16 %v1537
      %v1713 = vunpack.c.l.b16 %v1538
      %v1714 = vunpack.c.l.b16 %v1539
      %v1715 = vunpack.c.l.b16 %v1540
      %v1716 = vpack.c.b16 %v1701, %v1700
      %v1717 = vpack.c.b16 %v1703, %v1702
      %v1718 = vpack.c.b16 %v1705, %v1704
      %v1719 = vpack.c.b16 %v1707, %v1706
      %v1720 = vpack.c.b16 %v1709, %v1708
      %v1721 = vpack.c.b16 %v1711, %v1710
      %v1722 = vpack.c.b16 %v1713, %v1712
      %v1723 = vpack.c.b16 %v1715, %v1714
      %1732 = vmatprep.subr.bf16.mxu0 0
      %1733 = vmatpush1.bf16.msra.mxu0 %v1716
      %1734 = vmatprep.subr.bf16.mxu0 0
      %1735 = vmatpush1.bf16.msra.mxu0 %v1717
      %1736 = vmatprep.subr.bf16.mxu0 0
      %1737 = vmatpush1.bf16.msra.mxu0 %v1718
      %1738 = vmatprep.subr.bf16.mxu0 0
      %1739 = vmatpush1.bf16.msra.mxu0 %v1719
      %1740 = vmatprep.subr.bf16.mxu0 0
      %1741 = vmatpush1.bf16.msra.mxu0 %v1720
      %1742 = vmatprep.subr.bf16.mxu0 0
      %1743 = vmatpush1.bf16.msra.mxu0 %v1721
      %1744 = vmatprep.subr.bf16.mxu0 0
      %1745 = vmatpush1.bf16.msra.mxu0 %v1722
      %1746 = vmatprep.subr.bf16.mxu0 0
      %1747 = vmatpush1.bf16.msra.mxu0 %v1723
      %1748 = vmatprep.subr.bf16.mxu0 0
      %1749 = vmatpush1.bf16.msra.mxu0 0
      %1750 = vmatprep.subr.bf16.mxu0 0
      %1751 = vmatpush1.bf16.msra.mxu0 0
      %1752 = vmatprep.subr.bf16.mxu0 0
      %1753 = vmatpush1.bf16.msra.mxu0 0
      %1754 = vmatprep.subr.bf16.mxu0 0
      %1755 = vmatpush1.bf16.msra.mxu0 0
      %1756 = vmatprep.subr.bf16.mxu0 0
      %1757 = vmatpush1.bf16.msra.mxu0 0
      %1758 = vmatprep.subr.bf16.mxu0 0
      %1759 = vmatpush1.bf16.msra.mxu0 0
      %1760 = vmatprep.subr.bf16.mxu0 0
      %1761 = vmatpush1.bf16.msra.mxu0 0
      %1762 = vmatprep.subr.bf16.mxu0 0
      %1763 = vmatpush1.bf16.msra.mxu0 0
      %1764 = vmatprep.mubr.bf16.mxu0 0
      %1765 = vmatmul.mubr.bf16.gmra.mrb[0].mxu0 %v1682
      %v1766 = vpop.f32.mrb[0].mxu0
      %v1767 = vadd.f32 %v1640, %v1766
      %v1768 = vpop.f32.mrb[0].mxu0
      %v1769 = vpop.f32.mrb[0].mxu0
      %v1770 = vpop.f32.mrb[0].mxu0
      %1771 = vdwg.mxu0
      %v1772 = vld [vmem:[%s7] sm:$0x1]
      %v1774 = vlaneseq
      %v1775 = vshrl.u32 %v1774, 7
      %v1776 = vsub.s32 0, %v1775
      %v1777 = vrot.slane %v1772, %v1776
      %v1779 = vadd.f32 %v1767, %v1777
      %v1780 = vtanh.pop %v1779
      %v1781 = vpack.c.bf16 %v1780, %v1780
      %1782 = vst [vmem:[#allocation2] sm:$0xf] %v1781
      %1783 = vst [vmem:[#allocation17] sm:$0xff] %v639
      %1784 = vst [vmem:[#allocation19] sm:$0xff] %v637
      %vm1785 = vcmask 7168
      %1786 = vst.msk [vmem:[#allocation3] sm:$0xff] %vm1785, -inf
      %1787 = vst.msk [vmem:[#allocation4] sm:$0xff] %vm1785, 0.0
    $region69: #{tpu_custom_call.1} parent=1 // pred_fallthru
      _
    %v1788 = vld [vmem:[#allocation2] sm:$0xf]
    %v1789 = vld [vmem:[#allocation14] sm:$0xf]
    %v1790 = vld [vmem:[#allocation14 + $0x4] sm:$0xf]
    %v1791 = vld [vmem:[#allocation14 + $0x8] sm:$0xf]
    %v1792 = vld [vmem:[#allocation14 + $0xc] sm:$0xf]
    %v1793 = vld [vmem:[#allocation14 + $0x10] sm:$0xf]
    %v1794 = vld [vmem:[#allocation14 + $0x14] sm:$0xf]
    %v1795 = vld [vmem:[#allocation14 + $0x18] sm:$0xf]
    %v1796 = vld [vmem:[#allocation14 + $0x1c] sm:$0xf]
    %v1797 = vld [vmem:[#allocation14 + $0x20] sm:$0xf]
    %v1798 = vld [vmem:[#allocation14 + $0x24] sm:$0xf]
    %v1799 = vld [vmem:[#allocation14 + $0x28] sm:$0xf]
    %v1800 = vld [vmem:[#allocation14 + $0x2c] sm:$0xf]
    %v1801 = vld [vmem:[#allocation14 + $0x30] sm:$0xf]
    %v1802 = vld [vmem:[#allocation14 + $0x34] sm:$0xf]
    %v1803 = vld [vmem:[#allocation14 + $0x38] sm:$0xf]
    %v1804 = vld [vmem:[#allocation14 + $0x3c] sm:$0xf]
    %v1805 = vld [vmem:[%s9] sm:$0x1]
    %v1807 = vlaneseq
    %v1808 = vshrl.u32 %v1807, 7
    %v1809 = vsub.s32 0, %v1808
    %v1810 = vrot.slane %v1805, %v1809
    %v1828 = vunpack.c.l.b16 %v1789
    %v1829 = vunpack.c.l.b16 %v1790
    %v1830 = vunpack.c.l.b16 %v1791
    %v1831 = vunpack.c.l.b16 %v1792
    %v1832 = vunpack.c.l.b16 %v1793
    %v1833 = vunpack.c.l.b16 %v1794
    %v1834 = vunpack.c.l.b16 %v1795
    %v1835 = vunpack.c.l.b16 %v1796
    %v1836 = vunpack.c.l.b16 %v1797
    %v1837 = vunpack.c.l.b16 %v1798
    %v1838 = vunpack.c.l.b16 %v1799
    %v1839 = vunpack.c.l.b16 %v1800
    %v1840 = vunpack.c.l.b16 %v1801
    %v1841 = vunpack.c.l.b16 %v1802
    %v1842 = vunpack.c.l.b16 %v1803
    %v1843 = vunpack.c.l.b16 %v1804
    %v1844 = vpack.c.b16 %v1829, %v1828
    %v1845 = vpack.c.b16 %v1831, %v1830
    %v1846 = vpack.c.b16 %v1833, %v1832
    %v1847 = vpack.c.b16 %v1835, %v1834
    %v1848 = vpack.c.b16 %v1837, %v1836
    %v1849 = vpack.c.b16 %v1839, %v1838
    %v1850 = vpack.c.b16 %v1841, %v1840
    %v1851 = vpack.c.b16 %v1843, %v1842
    %1860 = vmatprep.subr.bf16.mxu0 0
    %1861 = vmatpush1.bf16.msra.mxu0 %v1844
    %1862 = vmatprep.subr.bf16.mxu0 0
    %1863 = vmatpush1.bf16.msra.mxu0 %v1845
    %1864 = vmatprep.subr.bf16.mxu0 0
    %1865 = vmatpush1.bf16.msra.mxu0 %v1846
    %1866 = vmatprep.subr.bf16.mxu0 0
    %1867 = vmatpush1.bf16.msra.mxu0 %v1847
    %1868 = vmatprep.subr.bf16.mxu0 0
    %1869 = vmatpush1.bf16.msra.mxu0 %v1848
    %1870 = vmatprep.subr.bf16.mxu0 0
    %1871 = vmatpush1.bf16.msra.mxu0 %v1849
    %1872 = vmatprep.subr.bf16.mxu0 0
    %1873 = vmatpush1.bf16.msra.mxu0 %v1850
    %1874 = vmatprep.subr.bf16.mxu0 0
    %1875 = vmatpush1.bf16.msra.mxu0 %v1851
    %1876 = vmatprep.subr.bf16.mxu0 0
    %1877 = vmatpush1.bf16.msra.mxu0 0
    %1878 = vmatprep.subr.bf16.mxu0 0
    %1879 = vmatpush1.bf16.msra.mxu0 0
    %1880 = vmatprep.subr.bf16.mxu0 0
    %1881 = vmatpush1.bf16.msra.mxu0 0
    %1882 = vmatprep.subr.bf16.mxu0 0
    %1883 = vmatpush1.bf16.msra.mxu0 0
    %1884 = vmatprep.subr.bf16.mxu0 0
    %1885 = vmatpush1.bf16.msra.mxu0 0
    %1886 = vmatprep.subr.bf16.mxu0 0
    %1887 = vmatpush1.bf16.msra.mxu0 0
    %1888 = vmatprep.subr.bf16.mxu0 0
    %1889 = vmatpush1.bf16.msra.mxu0 0
    %1890 = vmatprep.subr.bf16.mxu0 0
    %1891 = vmatpush1.bf16.msra.mxu0 0
    %1892 = vmatprep.mubr.bf16.mxu0 0
    %1893 = vmatmul.mubr.bf16.gmra.mrb[0].mxu0 %v1788
    %v1894 = vpop.f32.mrb[0].mxu0
    %v1895 = vadd.f32 %v1810, %v1894
    %v1896 = vpop.f32.mrb[0].mxu0
    %v1897 = vpop.f32.mrb[0].mxu0
    %v1898 = vpop.f32.mrb[0].mxu0
    %1899 = vdwg.mxu0
    %s1900 = smul.u32 0, 8
    %s1901 = scalar_lea.vmem [#allocation16], %s1900
    %1902 = vst [vmem:[%s1901] sm:$0xff] %v1895
    %v1903 = vld [vmem:[#allocation3] sm:$0xff]
    %1904 = vmax.xlane.f32.xlu0 %v1895
    %v1905 = vpop.xlane.xlu0 %1904
    %v1906 = vmax.f32 %v1903, %v1905
    %v1907 = vld [vmem:[#allocation4] sm:$0xff]
    %v1908 = vsub.f32 %v1903, %v1906
    %v1909 = vmul.f32 %v1908, 1.442695
    %v1910 = vpow.pop %v1909
    %v1911 = vmul.f32 %v1907, %v1910
    %1913 = vset.pattern.permute.xlu0 0
    %1914 = vperm.xlu0 %1913, %v1906
    %v1915 = vpop.permute.xlu0 %1914
    %v1917 = vsub.f32 %v1895, %v1915
    %v1918 = vmul.f32 %v1917, 1.442695
    %v1919 = vpow.pop %v1918
    %1920 = vadd.xlane.f32.xlu0 %v1919
    %v1921 = vpop.xlane.xlu0 %1920
    %v1922 = vadd.f32 %v1911, %v1921
    %vm1923 = vcmask 7168
    %1924 = vst.msk [vmem:[#allocation4] sm:$0xff] %vm1923, %v1922
    %1925 = vst.msk [vmem:[#allocation3] sm:$0xff] %vm1923, %v1906
    // Predicated region
    $region70: #{tpu_custom_call.1} parent=1 // pred_check
      %p1926 = pneg %p119
    $region71: #{tpu_custom_call.1} parent=1 // pred_check_branch
      %1928 = sbr.rel (%p1926) target = $region73
    $region72: #{tpu_custom_call.1} parent=1 // pred_region
      %v1929 = vld [vmem:[#allocation3] sm:$0xff]
      %v1930 = vld [vmem:[#allocation4] sm:$0xff]
      %v1931 = vlog2.pop %v1930
      %v1932 = vmul.f32 %v1931, 0.6931472
      %v1933 = vadd.f32 %v1929, %v1932
      %v1934 = vld [vmem:[#allocation16] sm:$0xff]
      %1936 = vset.pattern.permute.xlu0 0
      %1937 = vperm.xlu0 %1936, %v1933
      %v1938 = vpop.permute.xlu0 %1937
      %v1940 = vsub.f32 %v1934, %v1938
      %1941 = vst [vmem:[#allocation16] sm:$0xff] %v1940
    $region73: #{tpu_custom_call.1} parent=1 // pred_fallthru
      _
    // Predicated region
    $region74: #{tpu_custom_call.1} parent=1 // pred_check
      _
    $region75: #{tpu_custom_call.1} parent=1 // pred_check_branch
      %1943 = sbr.rel (0) target = $region77
    $region76: #{tpu_custom_call.1} parent=1 // pred_region
      %s1945 = ssub.s32 128, 128
      %1946 = vsyncadd [#allocation7], %s1945
      %s1948 = sshll.u32 [#allocation16], 4
      %s1949 = int_to_ptr.vmem [resolvable:$true] %s1948
      %1951 = dma.vmem_to_hbm [thread:$0]  %s1949, 128, %s10, [#allocation7]
    $region77: #{tpu_custom_call.1} parent=1 // pred_fallthru
      _
    // Predicated region
    $region78: #{tpu_custom_call.1} parent=1 // pred_check
      _
    $region79: #{tpu_custom_call.1} parent=1 // pred_check_branch
      %1953 = sbr.rel (0) target = $region81
    $region80: #{tpu_custom_call.1} parent=1 // pred_region
      %s1955 = ssub.s32 128, 128
      %1956 = vsyncadd [#allocation18], %s1955
      %s1958 = sshll.u32 [#allocation17], 4
      %s1959 = int_to_ptr.vmem [resolvable:$true] %s1958
      %1961 = dma.vmem_to_hbm [thread:$0]  %s1959, 128, %s11, [#allocation18]
    $region81: #{tpu_custom_call.1} parent=1 // pred_fallthru
      _
    // Predicated region
    $region82: #{tpu_custom_call.1} parent=1 // pred_check
      _
    $region83: #{tpu_custom_call.1} parent=1 // pred_check_branch
      %1963 = sbr.rel (0) target = $region85
    $region84: #{tpu_custom_call.1} parent=1 // pred_region
      %s1965 = ssub.s32 128, 128
      %1966 = vsyncadd [#allocation18], %s1965
      %s1968 = sshll.u32 [#allocation19], 4
      %s1969 = int_to_ptr.vmem [resolvable:$true] %s1968
      %1971 = dma.vmem_to_hbm [thread:$0]  %s1969, 128, %s12, [#allocation18]
    $region85: #{tpu_custom_call.1} parent=1 // pred_fallthru
      _
    // Predicated region
    $region86: #{tpu_custom_call.1} parent=1 // pred_check
      _
    $region87: #{tpu_custom_call.1} parent=1 // pred_check_branch
      %1973 = sbr.rel (0) target = $region89
    $region88: #{tpu_custom_call.1} parent=1 // pred_region
      %1974 = dma.done [#allocation7], 128
    $region89: #{tpu_custom_call.1} parent=1 // pred_fallthru
      _
    // Predicated region
    $region90: #{tpu_custom_call.1} parent=1 // pred_check
      _
    $region91: #{tpu_custom_call.1} parent=1 // pred_check_branch
      %1976 = sbr.rel (0) target = $region93
    $region92: #{tpu_custom_call.1} parent=1 // pred_region
      %1977 = dma.done [#allocation18], 128
    $region93: #{tpu_custom_call.1} parent=1 // pred_fallthru
      _
    // Predicated region
    $region94: #{tpu_custom_call.1} parent=1 // pred_check
      _
    $region95: #{tpu_custom_call.1} parent=1 // pred_check_branch
      %1979 = sbr.rel (0) target = $region97
    $region96: #{tpu_custom_call.1} parent=1 // pred_region
      %1980 = dma.done [#allocation18], 128
    $region97: #{tpu_custom_call.1} parent=1 // pred_fallthru
      _
    %1981 = vsyncpa [#allocation6], 1
    %1982 = vsyncpa [#allocation9], 1
    %1983 = vsyncpa [#allocation12], 1
    %1984 = vsyncpa [#allocation15], 1
    %1985 = vsyncpa [#allocation7], 1
    %1986 = vsyncpa [#allocation18], 1

</llo_original>
